<compile_context>
chip_gen: v7x
topology: tpu7x:2x2x1
jax: 0.10.0
libtpu: 0.0.40
codegen_flags: <defaults>
</compile_context>

<pallas_src>
import jax
import jax.numpy as jnp
from jax.experimental import pallas as pl
from jax.experimental.pallas import tpu as pltpu

NEURON_CDECAY = 1.0 / 2.0
NEURON_VDECAY = 3.0 / 4.0
NEURON_VTH = 0.5


def _round_up(x, m):
    return ((x + m - 1) // m) * m


def _make_spike_mlp_kernel(n_layers, spike_ts, tb):
    """n_layers = number of Linear layers (hidden layers + output population layer)."""
    inv_ts = 1.0 / float(spike_ts)

    def kernel(*refs):
        x_ref = refs[0]                           # (1, T*TB, in_p)  bf16 batch tile
        wb = refs[1:1 + 2 * n_layers]             # W0, b0, W1, b1, ...  (W bf16, b f32)
        out_ref = refs[1 + 2 * n_layers]          # (TB, out_p) f32

        # ---- loop-invariant loads, hoisted out of the unrolled time loop ----
        ws = [wb[2 * l][...] for l in range(n_layers)]          # bf16 (fan_in_p, h_p)
        sizes = [w.shape[1] for w in ws]
        # Bias broadcast hoisted (JAX does not CSE broadcast_in_dim).
        bias = [jnp.broadcast_to(wb[2 * l + 1][...], (tb, sizes[l]))
                for l in range(1, n_layers)]

        # ---- first-layer synapse for ALL timesteps: one tall MXU matmul ----
        x2 = x_ref[0]                                           # (T*TB, in_p) bf16
        syn0 = jnp.dot(x2, ws[0], preferred_element_type=jnp.float32) + wb[1][...]

        # ---- recurrent LIF state lives in registers, not VMEM scratch ----
        cur = [jnp.zeros((tb, s), jnp.float32) for s in sizes]
        volt = [jnp.zeros((tb, s), jnp.float32) for s in sizes]
        spk = [jnp.zeros((tb, s), jnp.float32) for s in sizes]
        acc = jnp.zeros((tb, sizes[-1]), jnp.float32)

        # spike_ts is small & static -> fully unrolled time loop (LLO visibility).
        # TODO(synk): for large spike_ts move state into lax.fori_loop carries.
        for t in range(spike_ts):
            pre = None
            for l in range(n_layers):
                if l == 0:
                    syn = syn0[t * tb:(t + 1) * tb]             # (TB, h0) f32, static slice
                else:
                    syn = jnp.dot(pre, ws[l],
                                  preferred_element_type=jnp.float32) + bias[l - 1]
                cur[l] = cur[l] * NEURON_CDECAY + syn
                # v*VDECAY*(1-s) with binary s  ==  select(s, 0, v*VDECAY)
                volt[l] = jnp.where(spk[l] > 0.0, 0.0,
                                    volt[l] * NEURON_VDECAY) + cur[l]
                spk[l] = (volt[l] > NEURON_VTH).astype(jnp.float32)
                if l + 1 < n_layers:
                    pre = spk[l].astype(jnp.bfloat16)           # exact: spikes are 0/1
            acc = acc + spk[-1]

        out_ref[...] = acc * inv_ts

    return kernel


def spike_mlp_forward(in_pop_spikes, params, hidden_sizes, out_pop_dim, spike_ts):
    """
    in_pop_spikes: (batch, in_pop_dim, spike_ts) float32, PyTorch layout.
    params: list of (W, b) with W shape (fan_in, fan_out), b shape (1, fan_out), f32.
    Returns out_pop_act: (batch, out_pop_dim) float32.
    """
    B, in_dim, T = in_pop_spikes.shape
    assert T == spike_ts
    n_layers = len(hidden_sizes) + 1
    sizes = list(hidden_sizes) + [out_pop_dim]

    # Lane-pad every layer width to 128; sublane-pad / tile the batch.
    in_p = _round_up(in_dim, 128)
    sizes_p = [_round_up(s, 128) for s in sizes]
    out_p = sizes_p[-1]
    fan_in = [in_dim] + sizes[:-1]
    fan_in_p = [in_p] + sizes_p[:-1]

    tb = min(128, _round_up(B, 8))              # batch tile (multiple of 8 sublanes)
    b_pad = _round_up(B, tb)
    n_tiles = b_pad // tb

    # Layout plumbing (plain XLA): time-major, zero-padded, grouped per batch
    # tile so each grid step sees one contiguous (T*TB, in_p) slab -> the tall
    # first-layer matmul needs no in-kernel reshape.
    x = jnp.transpose(in_pop_spikes.astype(jnp.float32), (2, 0, 1))    # (T, B, in)
    x = jnp.pad(x, ((0, 0), (0, b_pad - B), (0, in_p - in_dim)))
    x = x.reshape(T, n_tiles, tb, in_p).transpose(1, 0, 2, 3)
    x = x.reshape(n_tiles, T * tb, in_p).astype(jnp.bfloat16)          # spikes 0/1 -> exact

    flat_args = [x]
    in_specs = [pl.BlockSpec((1, T * tb, in_p), lambda i: (i, 0, 0))]
    for l, (w, b) in enumerate(params):
        w_pad = jnp.zeros((fan_in_p[l], sizes_p[l]), jnp.bfloat16)
        w_pad = w_pad.at[:fan_in[l], :sizes[l]].set(w.astype(jnp.bfloat16))
        b_pad_arr = jnp.zeros((1, sizes_p[l]), jnp.float32)
        b_pad_arr = b_pad_arr.at[:, :sizes[l]].set(b.astype(jnp.float32))
        flat_args += [w_pad, b_pad_arr]
        # Constant index_map -> weights/biases stay VMEM-resident across grid steps.
        in_specs.append(pl.BlockSpec((fan_in_p[l], sizes_p[l]), lambda i: (0, 0)))
        in_specs.append(pl.BlockSpec((1, sizes_p[l]), lambda i: (0, 0)))

    kernel = _make_spike_mlp_kernel(n_layers, spike_ts, tb)

    out_padded = pl.pallas_call(
        kernel,
        out_shape=jax.ShapeDtypeStruct((b_pad, out_p), jnp.float32),
        grid=(n_tiles,),
        in_specs=in_specs,
        out_specs=pl.BlockSpec((tb, out_p), lambda i: (i, 0)),
        compiler_params=pltpu.CompilerParams(
            # Batch tiles are independent -> megacore sharding on v7x, neutral on v5e/v6e.
            dimension_semantics=("parallel",),
            # Actual footprint here is ~1 MiB; 32 MiB is a safe scoped limit on v5e/v6e/v7x.
            vmem_limit_bytes=32 * 1024 * 1024,
        ),
    )(*flat_args)

    return out_padded[:B, :out_pop_dim]


def spike_mlp_reference(in_pop_spikes, params, hidden_sizes, out_pop_dim, spike_ts):
    """Pure-JAX reference mirroring the PyTorch forward (with the same bf16
    weight quantization used for the kernel's MXU operands)."""
    B = in_pop_spikes.shape[0]
    n_layers = len(hidden_sizes) + 1
    sizes = list(hidden_sizes) + [out_pop_dim]
    qparams = [(w.astype(jnp.bfloat16).astype(jnp.float32), b.astype(jnp.float32))
               for (w, b) in params]
    state = [[jnp.zeros((B, s), jnp.float32) for _ in range(3)] for s in sizes]
    acc = jnp.zeros((B, out_pop_dim), jnp.float32)
    for t in range(spike_ts):
        pre = in_pop_spikes[:, :, t].astype(jnp.float32)
        for l in range(n_layers):
            w, b = qparams[l]
            c, v, s = state[l]
            c = c * NEURON_CDECAY + (pre @ w + b)
            v = v * NEURON_VDECAY * (1.0 - s) + c
            s = (v > NEURON_VTH).astype(jnp.float32)
            state[l] = [c, v, s]
            pre = s
        acc = acc + pre
    return acc / spike_ts


def init_params(key, in_pop_dim, hidden_sizes, out_pop_dim):
    """Deterministic nn.Linear-style init: U(-1/sqrt(fan_in), 1/sqrt(fan_in))."""
    dims = [in_pop_dim] + list(hidden_sizes) + [out_pop_dim]
    params = []
    for i in range(len(dims) - 1):
        fan_in, fan_out = dims[i], dims[i + 1]
        key, kw, kb = jax.random.split(key, 3)
        bound = 1.0 / (fan_in ** 0.5)
        w = jax.random.uniform(kw, (fan_in, fan_out), jnp.float32, -bound, bound)
        b = jax.random.uniform(kb, (1, fan_out), jnp.float32, -bound, bound)
        params.append((w, b))
    return params


if __name__ == "__main__":
    key = jax.random.PRNGKey(0)
    batch = 2
    in_pop_dim = 32
    hidden_sizes = [64, 64]
    out_pop_dim = 16
    spike_ts = 8

    key, k_spk, k_par = jax.random.split(key, 3)
    in_pop_spikes = (
        jax.random.uniform(k_spk, (batch, in_pop_dim, spike_ts)) < 0.5
    ).astype(jnp.float32)
    params = init_params(k_par, in_pop_dim, hidden_sizes, out_pop_dim)

    out = spike_mlp_forward(in_pop_spikes, params, hidden_sizes, out_pop_dim, spike_ts)
    out = jax.block_until_ready(out)

    ref = spike_mlp_reference(in_pop_spikes, params, hidden_sizes, out_pop_dim, spike_ts)
    assert out.shape == (batch, out_pop_dim)
    assert jnp.allclose(out, ref, atol=1e-4), (out, ref)

    print("KERNEL_OK")
</pallas_src>

<mosaic_0001>
module attributes {stable_mosaic.version = 11 : i64} {
  func.func @kernel(%arg0: i32, %arg1: memref<1x64x128xbf16, #tpu.memory_space<vmem>>, %arg2: memref<128x128xbf16, #tpu.memory_space<vmem>>, %arg3: memref<1x128xf32, #tpu.memory_space<vmem>>, %arg4: memref<128x128xbf16, #tpu.memory_space<vmem>>, %arg5: memref<1x128xf32, #tpu.memory_space<vmem>>, %arg6: memref<128x128xbf16, #tpu.memory_space<vmem>>, %arg7: memref<1x128xf32, #tpu.memory_space<vmem>>, %arg8: memref<8x128xf32, #tpu.memory_space<vmem>>) attributes {dimension_semantics = [#tpu.dimension_semantics<parallel>], iteration_bounds = array<i64: 1>, scalar_prefetch = 0 : i64, scratch_operands = 0 : i64, tpu.core_type = #tpu.core_type<tc>, window_params = [{transform_indices = @transform_0, window_bounds = array<i64: 1, 64, 128>}, {pipeline_mode = #tpu.pipeline_mode<synchronous>, transform_indices = @transform_1, window_bounds = array<i64: 128, 128>}, {pipeline_mode = #tpu.pipeline_mode<synchronous>, transform_indices = @transform_2, window_bounds = array<i64: 1, 128>}, {pipeline_mode = #tpu.pipeline_mode<synchronous>, transform_indices = @transform_3, window_bounds = array<i64: 128, 128>}, {pipeline_mode = #tpu.pipeline_mode<synchronous>, transform_indices = @transform_4, window_bounds = array<i64: 1, 128>}, {pipeline_mode = #tpu.pipeline_mode<synchronous>, transform_indices = @transform_5, window_bounds = array<i64: 128, 128>}, {pipeline_mode = #tpu.pipeline_mode<synchronous>, transform_indices = @transform_6, window_bounds = array<i64: 1, 128>}, {transform_indices = @transform_7, window_bounds = array<i64: 8, 128>}]} {
    %c0 = arith.constant 0 : index
    %c0_0 = arith.constant 0 : index
    %0 = vector.load %arg2[%c0, %c0_0] : memref<128x128xbf16, #tpu.memory_space<vmem>>, vector<128x128xbf16>
    %c0_1 = arith.constant 0 : index
    %c0_2 = arith.constant 0 : index
    %1 = vector.load %arg4[%c0_1, %c0_2] : memref<128x128xbf16, #tpu.memory_space<vmem>>, vector<128x128xbf16>
    %c0_3 = arith.constant 0 : index
    %c0_4 = arith.constant 0 : index
    %2 = vector.load %arg6[%c0_3, %c0_4] : memref<128x128xbf16, #tpu.memory_space<vmem>>, vector<128x128xbf16>
    %c0_5 = arith.constant 0 : index
    %c0_6 = arith.constant 0 : index
    %3 = vector.load %arg5[%c0_5, %c0_6] : memref<1x128xf32, #tpu.memory_space<vmem>>, vector<1x128xf32>
    %4 = vector.shape_cast %3 : vector<1x128xf32> to vector<1x128xf32>
    %5 = vector.broadcast %4 : vector<1x128xf32> to vector<8x128xf32>
    %c0_7 = arith.constant 0 : index
    %c0_8 = arith.constant 0 : index
    %6 = vector.load %arg7[%c0_7, %c0_8] : memref<1x128xf32, #tpu.memory_space<vmem>>, vector<1x128xf32>
    %7 = vector.shape_cast %6 : vector<1x128xf32> to vector<1x128xf32>
    %8 = vector.broadcast %7 : vector<1x128xf32> to vector<8x128xf32>
    %c0_9 = arith.constant 0 : index
    %c0_10 = arith.constant 0 : index
    %c0_11 = arith.constant 0 : index
    %9 = vector.load %arg1[%c0_9, %c0_10, %c0_11] : memref<1x64x128xbf16, #tpu.memory_space<vmem>>, vector<1x64x128xbf16>
    %10 = vector.shape_cast %9 : vector<1x64x128xbf16> to vector<64x128xbf16>
    %cst = arith.constant dense<0.000000e+00> : vector<64x128xf32>
    %11 = tpu.matmul %10, %0, %cst {dimension_numbers = #tpu.dot_dimension_numbers<[1], [0], [0], [1], [0, 0, 1, 1], [], []>} : vector<64x128xbf16>, vector<128x128xbf16>, vector<64x128xf32> -> vector<64x128xf32>
    %c0_12 = arith.constant 0 : index
    %c0_13 = arith.constant 0 : index
    %12 = vector.load %arg3[%c0_12, %c0_13] : memref<1x128xf32, #tpu.memory_space<vmem>>, vector<1x128xf32>
    %13 = vector.broadcast %12 : vector<1x128xf32> to vector<64x128xf32>
    %14 = arith.addf %11, %13 : vector<64x128xf32>
    %cst_14 = arith.constant 0.000000e+00 : f32
    %15 = vector.broadcast %cst_14 : f32 to vector<8x128xf32>
    %cst_15 = arith.constant 0.000000e+00 : f32
    %16 = vector.broadcast %cst_15 : f32 to vector<8x128xf32>
    %cst_16 = arith.constant 0.000000e+00 : f32
    %17 = vector.broadcast %cst_16 : f32 to vector<8x128xf32>
    %cst_17 = arith.constant 0.000000e+00 : f32
    %18 = vector.broadcast %cst_17 : f32 to vector<8x128xf32>
    %cst_18 = arith.constant 0.000000e+00 : f32
    %19 = vector.broadcast %cst_18 : f32 to vector<8x128xf32>
    %cst_19 = arith.constant 0.000000e+00 : f32
    %20 = vector.broadcast %cst_19 : f32 to vector<8x128xf32>
    %cst_20 = arith.constant 0.000000e+00 : f32
    %21 = vector.broadcast %cst_20 : f32 to vector<8x128xf32>
    %cst_21 = arith.constant 0.000000e+00 : f32
    %22 = vector.broadcast %cst_21 : f32 to vector<8x128xf32>
    %cst_22 = arith.constant 0.000000e+00 : f32
    %23 = vector.broadcast %cst_22 : f32 to vector<8x128xf32>
    %cst_23 = arith.constant 0.000000e+00 : f32
    %24 = vector.broadcast %cst_23 : f32 to vector<8x128xf32>
    %25 = vector.extract_strided_slice %14 {offsets = [0, 0], sizes = [8, 128], strides = [1, 1]} : vector<64x128xf32> to vector<8x128xf32>
    %cst_24 = arith.constant 5.000000e-01 : f32
    %26 = vector.broadcast %cst_24 : f32 to vector<8x128xf32>
    %27 = arith.mulf %15, %26 : vector<8x128xf32>
    %28 = arith.addf %27, %25 : vector<8x128xf32>
    %cst_25 = arith.constant 0.000000e+00 : f32
    %29 = vector.broadcast %cst_25 : f32 to vector<8x128xf32>
    %30 = arith.cmpf ogt, %21, %29 : vector<8x128xf32>
    %cst_26 = arith.constant 7.500000e-01 : f32
    %31 = vector.broadcast %cst_26 : f32 to vector<8x128xf32>
    %32 = arith.mulf %18, %31 : vector<8x128xf32>
    %cst_27 = arith.constant 0.000000e+00 : f32
    %33 = vector.broadcast %cst_27 : f32 to vector<8x128xf32>
    %34 = arith.select %30, %33, %32 : vector<8x128xi1>, vector<8x128xf32>
    %35 = arith.addf %34, %28 : vector<8x128xf32>
    %cst_28 = arith.constant 5.000000e-01 : f32
    %36 = vector.broadcast %cst_28 : f32 to vector<8x128xf32>
    %37 = arith.cmpf ogt, %35, %36 : vector<8x128xf32>
    %38 = arith.extui %37 : vector<8x128xi1> to vector<8x128xi32>
    %39 = arith.sitofp %38 : vector<8x128xi32> to vector<8x128xf32>
    %40 = arith.truncf %39 : vector<8x128xf32> to vector<8x128xbf16>
    %cst_29 = arith.constant dense<0.000000e+00> : vector<8x128xf32>
    %41 = tpu.matmul %40, %1, %cst_29 {dimension_numbers = #tpu.dot_dimension_numbers<[1], [0], [0], [1], [0, 0, 1, 1], [], []>} : vector<8x128xbf16>, vector<128x128xbf16>, vector<8x128xf32> -> vector<8x128xf32>
    %42 = arith.addf %41, %5 : vector<8x128xf32>
    %cst_30 = arith.constant 5.000000e-01 : f32
    %43 = vector.broadcast %cst_30 : f32 to vector<8x128xf32>
    %44 = arith.mulf %16, %43 : vector<8x128xf32>
    %45 = arith.addf %44, %42 : vector<8x128xf32>
    %cst_31 = arith.constant 0.000000e+00 : f32
    %46 = vector.broadcast %cst_31 : f32 to vector<8x128xf32>
    %47 = arith.cmpf ogt, %22, %46 : vector<8x128xf32>
    %cst_32 = arith.constant 7.500000e-01 : f32
    %48 = vector.broadcast %cst_32 : f32 to vector<8x128xf32>
    %49 = arith.mulf %19, %48 : vector<8x128xf32>
    %cst_33 = arith.constant 0.000000e+00 : f32
    %50 = vector.broadcast %cst_33 : f32 to vector<8x128xf32>
    %51 = arith.select %47, %50, %49 : vector<8x128xi1>, vector<8x128xf32>
    %52 = arith.addf %51, %45 : vector<8x128xf32>
    %cst_34 = arith.constant 5.000000e-01 : f32
    %53 = vector.broadcast %cst_34 : f32 to vector<8x128xf32>
    %54 = arith.cmpf ogt, %52, %53 : vector<8x128xf32>
    %55 = arith.extui %54 : vector<8x128xi1> to vector<8x128xi32>
    %56 = arith.sitofp %55 : vector<8x128xi32> to vector<8x128xf32>
    %57 = arith.truncf %56 : vector<8x128xf32> to vector<8x128xbf16>
    %cst_35 = arith.constant dense<0.000000e+00> : vector<8x128xf32>
    %58 = tpu.matmul %57, %2, %cst_35 {dimension_numbers = #tpu.dot_dimension_numbers<[1], [0], [0], [1], [0, 0, 1, 1], [], []>} : vector<8x128xbf16>, vector<128x128xbf16>, vector<8x128xf32> -> vector<8x128xf32>
    %59 = arith.addf %58, %8 : vector<8x128xf32>
    %cst_36 = arith.constant 5.000000e-01 : f32
    %60 = vector.broadcast %cst_36 : f32 to vector<8x128xf32>
    %61 = arith.mulf %17, %60 : vector<8x128xf32>
    %62 = arith.addf %61, %59 : vector<8x128xf32>
    %cst_37 = arith.constant 0.000000e+00 : f32
    %63 = vector.broadcast %cst_37 : f32 to vector<8x128xf32>
    %64 = arith.cmpf ogt, %23, %63 : vector<8x128xf32>
    %cst_38 = arith.constant 7.500000e-01 : f32
    %65 = vector.broadcast %cst_38 : f32 to vector<8x128xf32>
    %66 = arith.mulf %20, %65 : vector<8x128xf32>
    %cst_39 = arith.constant 0.000000e+00 : f32
    %67 = vector.broadcast %cst_39 : f32 to vector<8x128xf32>
    %68 = arith.select %64, %67, %66 : vector<8x128xi1>, vector<8x128xf32>
    %69 = arith.addf %68, %62 : vector<8x128xf32>
    %cst_40 = arith.constant 5.000000e-01 : f32
    %70 = vector.broadcast %cst_40 : f32 to vector<8x128xf32>
    %71 = arith.cmpf ogt, %69, %70 : vector<8x128xf32>
    %72 = arith.extui %71 : vector<8x128xi1> to vector<8x128xi32>
    %73 = arith.sitofp %72 : vector<8x128xi32> to vector<8x128xf32>
    %74 = arith.addf %24, %73 : vector<8x128xf32>
    %75 = vector.extract_strided_slice %14 {offsets = [8, 0], sizes = [8, 128], strides = [1, 1]} : vector<64x128xf32> to vector<8x128xf32>
    %cst_41 = arith.constant 5.000000e-01 : f32
    %76 = vector.broadcast %cst_41 : f32 to vector<8x128xf32>
    %77 = arith.mulf %28, %76 : vector<8x128xf32>
    %78 = arith.addf %77, %75 : vector<8x128xf32>
    %cst_42 = arith.constant 0.000000e+00 : f32
    %79 = vector.broadcast %cst_42 : f32 to vector<8x128xf32>
    %80 = arith.cmpf ogt, %39, %79 : vector<8x128xf32>
    %cst_43 = arith.constant 7.500000e-01 : f32
    %81 = vector.broadcast %cst_43 : f32 to vector<8x128xf32>
    %82 = arith.mulf %35, %81 : vector<8x128xf32>
    %cst_44 = arith.constant 0.000000e+00 : f32
    %83 = vector.broadcast %cst_44 : f32 to vector<8x128xf32>
    %84 = arith.select %80, %83, %82 : vector<8x128xi1>, vector<8x128xf32>
    %85 = arith.addf %84, %78 : vector<8x128xf32>
    %cst_45 = arith.constant 5.000000e-01 : f32
    %86 = vector.broadcast %cst_45 : f32 to vector<8x128xf32>
    %87 = arith.cmpf ogt, %85, %86 : vector<8x128xf32>
    %88 = arith.extui %87 : vector<8x128xi1> to vector<8x128xi32>
    %89 = arith.sitofp %88 : vector<8x128xi32> to vector<8x128xf32>
    %90 = arith.truncf %89 : vector<8x128xf32> to vector<8x128xbf16>
    %cst_46 = arith.constant dense<0.000000e+00> : vector<8x128xf32>
    %91 = tpu.matmul %90, %1, %cst_46 {dimension_numbers = #tpu.dot_dimension_numbers<[1], [0], [0], [1], [0, 0, 1, 1], [], []>} : vector<8x128xbf16>, vector<128x128xbf16>, vector<8x128xf32> -> vector<8x128xf32>
    %92 = arith.addf %91, %5 : vector<8x128xf32>
    %cst_47 = arith.constant 5.000000e-01 : f32
    %93 = vector.broadcast %cst_47 : f32 to vector<8x128xf32>
    %94 = arith.mulf %45, %93 : vector<8x128xf32>
    %95 = arith.addf %94, %92 : vector<8x128xf32>
    %cst_48 = arith.constant 0.000000e+00 : f32
    %96 = vector.broadcast %cst_48 : f32 to vector<8x128xf32>
    %97 = arith.cmpf ogt, %56, %96 : vector<8x128xf32>
    %cst_49 = arith.constant 7.500000e-01 : f32
    %98 = vector.broadcast %cst_49 : f32 to vector<8x128xf32>
    %99 = arith.mulf %52, %98 : vector<8x128xf32>
    %cst_50 = arith.constant 0.000000e+00 : f32
    %100 = vector.broadcast %cst_50 : f32 to vector<8x128xf32>
    %101 = arith.select %97, %100, %99 : vector<8x128xi1>, vector<8x128xf32>
    %102 = arith.addf %101, %95 : vector<8x128xf32>
    %cst_51 = arith.constant 5.000000e-01 : f32
    %103 = vector.broadcast %cst_51 : f32 to vector<8x128xf32>
    %104 = arith.cmpf ogt, %102, %103 : vector<8x128xf32>
    %105 = arith.extui %104 : vector<8x128xi1> to vector<8x128xi32>
    %106 = arith.sitofp %105 : vector<8x128xi32> to vector<8x128xf32>
    %107 = arith.truncf %106 : vector<8x128xf32> to vector<8x128xbf16>
    %cst_52 = arith.constant dense<0.000000e+00> : vector<8x128xf32>
    %108 = tpu.matmul %107, %2, %cst_52 {dimension_numbers = #tpu.dot_dimension_numbers<[1], [0], [0], [1], [0, 0, 1, 1], [], []>} : vector<8x128xbf16>, vector<128x128xbf16>, vector<8x128xf32> -> vector<8x128xf32>
    %109 = arith.addf %108, %8 : vector<8x128xf32>
    %cst_53 = arith.constant 5.000000e-01 : f32
    %110 = vector.broadcast %cst_53 : f32 to vector<8x128xf32>
    %111 = arith.mulf %62, %110 : vector<8x128xf32>
    %112 = arith.addf %111, %109 : vector<8x128xf32>
    %cst_54 = arith.constant 0.000000e+00 : f32
    %113 = vector.broadcast %cst_54 : f32 to vector<8x128xf32>
    %114 = arith.cmpf ogt, %73, %113 : vector<8x128xf32>
    %cst_55 = arith.constant 7.500000e-01 : f32
    %115 = vector.broadcast %cst_55 : f32 to vector<8x128xf32>
    %116 = arith.mulf %69, %115 : vector<8x128xf32>
    %cst_56 = arith.constant 0.000000e+00 : f32
    %117 = vector.broadcast %cst_56 : f32 to vector<8x128xf32>
    %118 = arith.select %114, %117, %116 : vector<8x128xi1>, vector<8x128xf32>
    %119 = arith.addf %118, %112 : vector<8x128xf32>
    %cst_57 = arith.constant 5.000000e-01 : f32
    %120 = vector.broadcast %cst_57 : f32 to vector<8x128xf32>
    %121 = arith.cmpf ogt, %119, %120 : vector<8x128xf32>
    %122 = arith.extui %121 : vector<8x128xi1> to vector<8x128xi32>
    %123 = arith.sitofp %122 : vector<8x128xi32> to vector<8x128xf32>
    %124 = arith.addf %74, %123 : vector<8x128xf32>
    %125 = vector.extract_strided_slice %14 {offsets = [16, 0], sizes = [8, 128], strides = [1, 1]} : vector<64x128xf32> to vector<8x128xf32>
    %cst_58 = arith.constant 5.000000e-01 : f32
    %126 = vector.broadcast %cst_58 : f32 to vector<8x128xf32>
    %127 = arith.mulf %78, %126 : vector<8x128xf32>
    %128 = arith.addf %127, %125 : vector<8x128xf32>
    %cst_59 = arith.constant 0.000000e+00 : f32
    %129 = vector.broadcast %cst_59 : f32 to vector<8x128xf32>
    %130 = arith.cmpf ogt, %89, %129 : vector<8x128xf32>
    %cst_60 = arith.constant 7.500000e-01 : f32
    %131 = vector.broadcast %cst_60 : f32 to vector<8x128xf32>
    %132 = arith.mulf %85, %131 : vector<8x128xf32>
    %cst_61 = arith.constant 0.000000e+00 : f32
    %133 = vector.broadcast %cst_61 : f32 to vector<8x128xf32>
    %134 = arith.select %130, %133, %132 : vector<8x128xi1>, vector<8x128xf32>
    %135 = arith.addf %134, %128 : vector<8x128xf32>
    %cst_62 = arith.constant 5.000000e-01 : f32
    %136 = vector.broadcast %cst_62 : f32 to vector<8x128xf32>
    %137 = arith.cmpf ogt, %135, %136 : vector<8x128xf32>
    %138 = arith.extui %137 : vector<8x128xi1> to vector<8x128xi32>
    %139 = arith.sitofp %138 : vector<8x128xi32> to vector<8x128xf32>
    %140 = arith.truncf %139 : vector<8x128xf32> to vector<8x128xbf16>
    %cst_63 = arith.constant dense<0.000000e+00> : vector<8x128xf32>
    %141 = tpu.matmul %140, %1, %cst_63 {dimension_numbers = #tpu.dot_dimension_numbers<[1], [0], [0], [1], [0, 0, 1, 1], [], []>} : vector<8x128xbf16>, vector<128x128xbf16>, vector<8x128xf32> -> vector<8x128xf32>
    %142 = arith.addf %141, %5 : vector<8x128xf32>
    %cst_64 = arith.constant 5.000000e-01 : f32
    %143 = vector.broadcast %cst_64 : f32 to vector<8x128xf32>
    %144 = arith.mulf %95, %143 : vector<8x128xf32>
    %145 = arith.addf %144, %142 : vector<8x128xf32>
    %cst_65 = arith.constant 0.000000e+00 : f32
    %146 = vector.broadcast %cst_65 : f32 to vector<8x128xf32>
    %147 = arith.cmpf ogt, %106, %146 : vector<8x128xf32>
    %cst_66 = arith.constant 7.500000e-01 : f32
    %148 = vector.broadcast %cst_66 : f32 to vector<8x128xf32>
    %149 = arith.mulf %102, %148 : vector<8x128xf32>
    %cst_67 = arith.constant 0.000000e+00 : f32
    %150 = vector.broadcast %cst_67 : f32 to vector<8x128xf32>
    %151 = arith.select %147, %150, %149 : vector<8x128xi1>, vector<8x128xf32>
    %152 = arith.addf %151, %145 : vector<8x128xf32>
    %cst_68 = arith.constant 5.000000e-01 : f32
    %153 = vector.broadcast %cst_68 : f32 to vector<8x128xf32>
    %154 = arith.cmpf ogt, %152, %153 : vector<8x128xf32>
    %155 = arith.extui %154 : vector<8x128xi1> to vector<8x128xi32>
    %156 = arith.sitofp %155 : vector<8x128xi32> to vector<8x128xf32>
    %157 = arith.truncf %156 : vector<8x128xf32> to vector<8x128xbf16>
    %cst_69 = arith.constant dense<0.000000e+00> : vector<8x128xf32>
    %158 = tpu.matmul %157, %2, %cst_69 {dimension_numbers = #tpu.dot_dimension_numbers<[1], [0], [0], [1], [0, 0, 1, 1], [], []>} : vector<8x128xbf16>, vector<128x128xbf16>, vector<8x128xf32> -> vector<8x128xf32>
    %159 = arith.addf %158, %8 : vector<8x128xf32>
    %cst_70 = arith.constant 5.000000e-01 : f32
    %160 = vector.broadcast %cst_70 : f32 to vector<8x128xf32>
    %161 = arith.mulf %112, %160 : vector<8x128xf32>
    %162 = arith.addf %161, %159 : vector<8x128xf32>
    %cst_71 = arith.constant 0.000000e+00 : f32
    %163 = vector.broadcast %cst_71 : f32 to vector<8x128xf32>
    %164 = arith.cmpf ogt, %123, %163 : vector<8x128xf32>
    %cst_72 = arith.constant 7.500000e-01 : f32
    %165 = vector.broadcast %cst_72 : f32 to vector<8x128xf32>
    %166 = arith.mulf %119, %165 : vector<8x128xf32>
    %cst_73 = arith.constant 0.000000e+00 : f32
    %167 = vector.broadcast %cst_73 : f32 to vector<8x128xf32>
    %168 = arith.select %164, %167, %166 : vector<8x128xi1>, vector<8x128xf32>
    %169 = arith.addf %168, %162 : vector<8x128xf32>
    %cst_74 = arith.constant 5.000000e-01 : f32
    %170 = vector.broadcast %cst_74 : f32 to vector<8x128xf32>
    %171 = arith.cmpf ogt, %169, %170 : vector<8x128xf32>
    %172 = arith.extui %171 : vector<8x128xi1> to vector<8x128xi32>
    %173 = arith.sitofp %172 : vector<8x128xi32> to vector<8x128xf32>
    %174 = arith.addf %124, %173 : vector<8x128xf32>
    %175 = vector.extract_strided_slice %14 {offsets = [24, 0], sizes = [8, 128], strides = [1, 1]} : vector<64x128xf32> to vector<8x128xf32>
    %cst_75 = arith.constant 5.000000e-01 : f32
    %176 = vector.broadcast %cst_75 : f32 to vector<8x128xf32>
    %177 = arith.mulf %128, %176 : vector<8x128xf32>
    %178 = arith.addf %177, %175 : vector<8x128xf32>
    %cst_76 = arith.constant 0.000000e+00 : f32
    %179 = vector.broadcast %cst_76 : f32 to vector<8x128xf32>
    %180 = arith.cmpf ogt, %139, %179 : vector<8x128xf32>
    %cst_77 = arith.constant 7.500000e-01 : f32
    %181 = vector.broadcast %cst_77 : f32 to vector<8x128xf32>
    %182 = arith.mulf %135, %181 : vector<8x128xf32>
    %cst_78 = arith.constant 0.000000e+00 : f32
    %183 = vector.broadcast %cst_78 : f32 to vector<8x128xf32>
    %184 = arith.select %180, %183, %182 : vector<8x128xi1>, vector<8x128xf32>
    %185 = arith.addf %184, %178 : vector<8x128xf32>
    %cst_79 = arith.constant 5.000000e-01 : f32
    %186 = vector.broadcast %cst_79 : f32 to vector<8x128xf32>
    %187 = arith.cmpf ogt, %185, %186 : vector<8x128xf32>
    %188 = arith.extui %187 : vector<8x128xi1> to vector<8x128xi32>
    %189 = arith.sitofp %188 : vector<8x128xi32> to vector<8x128xf32>
    %190 = arith.truncf %189 : vector<8x128xf32> to vector<8x128xbf16>
    %cst_80 = arith.constant dense<0.000000e+00> : vector<8x128xf32>
    %191 = tpu.matmul %190, %1, %cst_80 {dimension_numbers = #tpu.dot_dimension_numbers<[1], [0], [0], [1], [0, 0, 1, 1], [], []>} : vector<8x128xbf16>, vector<128x128xbf16>, vector<8x128xf32> -> vector<8x128xf32>
    %192 = arith.addf %191, %5 : vector<8x128xf32>
    %cst_81 = arith.constant 5.000000e-01 : f32
    %193 = vector.broadcast %cst_81 : f32 to vector<8x128xf32>
    %194 = arith.mulf %145, %193 : vector<8x128xf32>
    %195 = arith.addf %194, %192 : vector<8x128xf32>
    %cst_82 = arith.constant 0.000000e+00 : f32
    %196 = vector.broadcast %cst_82 : f32 to vector<8x128xf32>
    %197 = arith.cmpf ogt, %156, %196 : vector<8x128xf32>
    %cst_83 = arith.constant 7.500000e-01 : f32
    %198 = vector.broadcast %cst_83 : f32 to vector<8x128xf32>
    %199 = arith.mulf %152, %198 : vector<8x128xf32>
    %cst_84 = arith.constant 0.000000e+00 : f32
    %200 = vector.broadcast %cst_84 : f32 to vector<8x128xf32>
    %201 = arith.select %197, %200, %199 : vector<8x128xi1>, vector<8x128xf32>
    %202 = arith.addf %201, %195 : vector<8x128xf32>
    %cst_85 = arith.constant 5.000000e-01 : f32
    %203 = vector.broadcast %cst_85 : f32 to vector<8x128xf32>
    %204 = arith.cmpf ogt, %202, %203 : vector<8x128xf32>
    %205 = arith.extui %204 : vector<8x128xi1> to vector<8x128xi32>
    %206 = arith.sitofp %205 : vector<8x128xi32> to vector<8x128xf32>
    %207 = arith.truncf %206 : vector<8x128xf32> to vector<8x128xbf16>
    %cst_86 = arith.constant dense<0.000000e+00> : vector<8x128xf32>
    %208 = tpu.matmul %207, %2, %cst_86 {dimension_numbers = #tpu.dot_dimension_numbers<[1], [0], [0], [1], [0, 0, 1, 1], [], []>} : vector<8x128xbf16>, vector<128x128xbf16>, vector<8x128xf32> -> vector<8x128xf32>
    %209 = arith.addf %208, %8 : vector<8x128xf32>
    %cst_87 = arith.constant 5.000000e-01 : f32
    %210 = vector.broadcast %cst_87 : f32 to vector<8x128xf32>
    %211 = arith.mulf %162, %210 : vector<8x128xf32>
    %212 = arith.addf %211, %209 : vector<8x128xf32>
    %cst_88 = arith.constant 0.000000e+00 : f32
    %213 = vector.broadcast %cst_88 : f32 to vector<8x128xf32>
    %214 = arith.cmpf ogt, %173, %213 : vector<8x128xf32>
    %cst_89 = arith.constant 7.500000e-01 : f32
    %215 = vector.broadcast %cst_89 : f32 to vector<8x128xf32>
    %216 = arith.mulf %169, %215 : vector<8x128xf32>
    %cst_90 = arith.constant 0.000000e+00 : f32
    %217 = vector.broadcast %cst_90 : f32 to vector<8x128xf32>
    %218 = arith.select %214, %217, %216 : vector<8x128xi1>, vector<8x128xf32>
    %219 = arith.addf %218, %212 : vector<8x128xf32>
    %cst_91 = arith.constant 5.000000e-01 : f32
    %220 = vector.broadcast %cst_91 : f32 to vector<8x128xf32>
    %221 = arith.cmpf ogt, %219, %220 : vector<8x128xf32>
    %222 = arith.extui %221 : vector<8x128xi1> to vector<8x128xi32>
    %223 = arith.sitofp %222 : vector<8x128xi32> to vector<8x128xf32>
    %224 = arith.addf %174, %223 : vector<8x128xf32>
    %225 = vector.extract_strided_slice %14 {offsets = [32, 0], sizes = [8, 128], strides = [1, 1]} : vector<64x128xf32> to vector<8x128xf32>
    %cst_92 = arith.constant 5.000000e-01 : f32
    %226 = vector.broadcast %cst_92 : f32 to vector<8x128xf32>
    %227 = arith.mulf %178, %226 : vector<8x128xf32>
    %228 = arith.addf %227, %225 : vector<8x128xf32>
    %cst_93 = arith.constant 0.000000e+00 : f32
    %229 = vector.broadcast %cst_93 : f32 to vector<8x128xf32>
    %230 = arith.cmpf ogt, %189, %229 : vector<8x128xf32>
    %cst_94 = arith.constant 7.500000e-01 : f32
    %231 = vector.broadcast %cst_94 : f32 to vector<8x128xf32>
    %232 = arith.mulf %185, %231 : vector<8x128xf32>
    %cst_95 = arith.constant 0.000000e+00 : f32
    %233 = vector.broadcast %cst_95 : f32 to vector<8x128xf32>
    %234 = arith.select %230, %233, %232 : vector<8x128xi1>, vector<8x128xf32>
    %235 = arith.addf %234, %228 : vector<8x128xf32>
    %cst_96 = arith.constant 5.000000e-01 : f32
    %236 = vector.broadcast %cst_96 : f32 to vector<8x128xf32>
    %237 = arith.cmpf ogt, %235, %236 : vector<8x128xf32>
    %238 = arith.extui %237 : vector<8x128xi1> to vector<8x128xi32>
    %239 = arith.sitofp %238 : vector<8x128xi32> to vector<8x128xf32>
    %240 = arith.truncf %239 : vector<8x128xf32> to vector<8x128xbf16>
    %cst_97 = arith.constant dense<0.000000e+00> : vector<8x128xf32>
    %241 = tpu.matmul %240, %1, %cst_97 {dimension_numbers = #tpu.dot_dimension_numbers<[1], [0], [0], [1], [0, 0, 1, 1], [], []>} : vector<8x128xbf16>, vector<128x128xbf16>, vector<8x128xf32> -> vector<8x128xf32>
    %242 = arith.addf %241, %5 : vector<8x128xf32>
    %cst_98 = arith.constant 5.000000e-01 : f32
    %243 = vector.broadcast %cst_98 : f32 to vector<8x128xf32>
    %244 = arith.mulf %195, %243 : vector<8x128xf32>
    %245 = arith.addf %244, %242 : vector<8x128xf32>
    %cst_99 = arith.constant 0.000000e+00 : f32
    %246 = vector.broadcast %cst_99 : f32 to vector<8x128xf32>
    %247 = arith.cmpf ogt, %206, %246 : vector<8x128xf32>
    %cst_100 = arith.constant 7.500000e-01 : f32
    %248 = vector.broadcast %cst_100 : f32 to vector<8x128xf32>
    %249 = arith.mulf %202, %248 : vector<8x128xf32>
    %cst_101 = arith.constant 0.000000e+00 : f32
    %250 = vector.broadcast %cst_101 : f32 to vector<8x128xf32>
    %251 = arith.select %247, %250, %249 : vector<8x128xi1>, vector<8x128xf32>
    %252 = arith.addf %251, %245 : vector<8x128xf32>
    %cst_102 = arith.constant 5.000000e-01 : f32
    %253 = vector.broadcast %cst_102 : f32 to vector<8x128xf32>
    %254 = arith.cmpf ogt, %252, %253 : vector<8x128xf32>
    %255 = arith.extui %254 : vector<8x128xi1> to vector<8x128xi32>
    %256 = arith.sitofp %255 : vector<8x128xi32> to vector<8x128xf32>
    %257 = arith.truncf %256 : vector<8x128xf32> to vector<8x128xbf16>
    %cst_103 = arith.constant dense<0.000000e+00> : vector<8x128xf32>
    %258 = tpu.matmul %257, %2, %cst_103 {dimension_numbers = #tpu.dot_dimension_numbers<[1], [0], [0], [1], [0, 0, 1, 1], [], []>} : vector<8x128xbf16>, vector<128x128xbf16>, vector<8x128xf32> -> vector<8x128xf32>
    %259 = arith.addf %258, %8 : vector<8x128xf32>
    %cst_104 = arith.constant 5.000000e-01 : f32
    %260 = vector.broadcast %cst_104 : f32 to vector<8x128xf32>
    %261 = arith.mulf %212, %260 : vector<8x128xf32>
    %262 = arith.addf %261, %259 : vector<8x128xf32>
    %cst_105 = arith.constant 0.000000e+00 : f32
    %263 = vector.broadcast %cst_105 : f32 to vector<8x128xf32>
    %264 = arith.cmpf ogt, %223, %263 : vector<8x128xf32>
    %cst_106 = arith.constant 7.500000e-01 : f32
    %265 = vector.broadcast %cst_106 : f32 to vector<8x128xf32>
    %266 = arith.mulf %219, %265 : vector<8x128xf32>
    %cst_107 = arith.constant 0.000000e+00 : f32
    %267 = vector.broadcast %cst_107 : f32 to vector<8x128xf32>
    %268 = arith.select %264, %267, %266 : vector<8x128xi1>, vector<8x128xf32>
    %269 = arith.addf %268, %262 : vector<8x128xf32>
    %cst_108 = arith.constant 5.000000e-01 : f32
    %270 = vector.broadcast %cst_108 : f32 to vector<8x128xf32>
    %271 = arith.cmpf ogt, %269, %270 : vector<8x128xf32>
    %272 = arith.extui %271 : vector<8x128xi1> to vector<8x128xi32>
    %273 = arith.sitofp %272 : vector<8x128xi32> to vector<8x128xf32>
    %274 = arith.addf %224, %273 : vector<8x128xf32>
    %275 = vector.extract_strided_slice %14 {offsets = [40, 0], sizes = [8, 128], strides = [1, 1]} : vector<64x128xf32> to vector<8x128xf32>
    %cst_109 = arith.constant 5.000000e-01 : f32
    %276 = vector.broadcast %cst_109 : f32 to vector<8x128xf32>
    %277 = arith.mulf %228, %276 : vector<8x128xf32>
    %278 = arith.addf %277, %275 : vector<8x128xf32>
    %cst_110 = arith.constant 0.000000e+00 : f32
    %279 = vector.broadcast %cst_110 : f32 to vector<8x128xf32>
    %280 = arith.cmpf ogt, %239, %279 : vector<8x128xf32>
    %cst_111 = arith.constant 7.500000e-01 : f32
    %281 = vector.broadcast %cst_111 : f32 to vector<8x128xf32>
    %282 = arith.mulf %235, %281 : vector<8x128xf32>
    %cst_112 = arith.constant 0.000000e+00 : f32
    %283 = vector.broadcast %cst_112 : f32 to vector<8x128xf32>
    %284 = arith.select %280, %283, %282 : vector<8x128xi1>, vector<8x128xf32>
    %285 = arith.addf %284, %278 : vector<8x128xf32>
    %cst_113 = arith.constant 5.000000e-01 : f32
    %286 = vector.broadcast %cst_113 : f32 to vector<8x128xf32>
    %287 = arith.cmpf ogt, %285, %286 : vector<8x128xf32>
    %288 = arith.extui %287 : vector<8x128xi1> to vector<8x128xi32>
    %289 = arith.sitofp %288 : vector<8x128xi32> to vector<8x128xf32>
    %290 = arith.truncf %289 : vector<8x128xf32> to vector<8x128xbf16>
    %cst_114 = arith.constant dense<0.000000e+00> : vector<8x128xf32>
    %291 = tpu.matmul %290, %1, %cst_114 {dimension_numbers = #tpu.dot_dimension_numbers<[1], [0], [0], [1], [0, 0, 1, 1], [], []>} : vector<8x128xbf16>, vector<128x128xbf16>, vector<8x128xf32> -> vector<8x128xf32>
    %292 = arith.addf %291, %5 : vector<8x128xf32>
    %cst_115 = arith.constant 5.000000e-01 : f32
    %293 = vector.broadcast %cst_115 : f32 to vector<8x128xf32>
    %294 = arith.mulf %245, %293 : vector<8x128xf32>
    %295 = arith.addf %294, %292 : vector<8x128xf32>
    %cst_116 = arith.constant 0.000000e+00 : f32
    %296 = vector.broadcast %cst_116 : f32 to vector<8x128xf32>
    %297 = arith.cmpf ogt, %256, %296 : vector<8x128xf32>
    %cst_117 = arith.constant 7.500000e-01 : f32
    %298 = vector.broadcast %cst_117 : f32 to vector<8x128xf32>
    %299 = arith.mulf %252, %298 : vector<8x128xf32>
    %cst_118 = arith.constant 0.000000e+00 : f32
    %300 = vector.broadcast %cst_118 : f32 to vector<8x128xf32>
    %301 = arith.select %297, %300, %299 : vector<8x128xi1>, vector<8x128xf32>
    %302 = arith.addf %301, %295 : vector<8x128xf32>
    %cst_119 = arith.constant 5.000000e-01 : f32
    %303 = vector.broadcast %cst_119 : f32 to vector<8x128xf32>
    %304 = arith.cmpf ogt, %302, %303 : vector<8x128xf32>
    %305 = arith.extui %304 : vector<8x128xi1> to vector<8x128xi32>
    %306 = arith.sitofp %305 : vector<8x128xi32> to vector<8x128xf32>
    %307 = arith.truncf %306 : vector<8x128xf32> to vector<8x128xbf16>
    %cst_120 = arith.constant dense<0.000000e+00> : vector<8x128xf32>
    %308 = tpu.matmul %307, %2, %cst_120 {dimension_numbers = #tpu.dot_dimension_numbers<[1], [0], [0], [1], [0, 0, 1, 1], [], []>} : vector<8x128xbf16>, vector<128x128xbf16>, vector<8x128xf32> -> vector<8x128xf32>
    %309 = arith.addf %308, %8 : vector<8x128xf32>
    %cst_121 = arith.constant 5.000000e-01 : f32
    %310 = vector.broadcast %cst_121 : f32 to vector<8x128xf32>
    %311 = arith.mulf %262, %310 : vector<8x128xf32>
    %312 = arith.addf %311, %309 : vector<8x128xf32>
    %cst_122 = arith.constant 0.000000e+00 : f32
    %313 = vector.broadcast %cst_122 : f32 to vector<8x128xf32>
    %314 = arith.cmpf ogt, %273, %313 : vector<8x128xf32>
    %cst_123 = arith.constant 7.500000e-01 : f32
    %315 = vector.broadcast %cst_123 : f32 to vector<8x128xf32>
    %316 = arith.mulf %269, %315 : vector<8x128xf32>
    %cst_124 = arith.constant 0.000000e+00 : f32
    %317 = vector.broadcast %cst_124 : f32 to vector<8x128xf32>
    %318 = arith.select %314, %317, %316 : vector<8x128xi1>, vector<8x128xf32>
    %319 = arith.addf %318, %312 : vector<8x128xf32>
    %cst_125 = arith.constant 5.000000e-01 : f32
    %320 = vector.broadcast %cst_125 : f32 to vector<8x128xf32>
    %321 = arith.cmpf ogt, %319, %320 : vector<8x128xf32>
    %322 = arith.extui %321 : vector<8x128xi1> to vector<8x128xi32>
    %323 = arith.sitofp %322 : vector<8x128xi32> to vector<8x128xf32>
    %324 = arith.addf %274, %323 : vector<8x128xf32>
    %325 = vector.extract_strided_slice %14 {offsets = [48, 0], sizes = [8, 128], strides = [1, 1]} : vector<64x128xf32> to vector<8x128xf32>
    %cst_126 = arith.constant 5.000000e-01 : f32
    %326 = vector.broadcast %cst_126 : f32 to vector<8x128xf32>
    %327 = arith.mulf %278, %326 : vector<8x128xf32>
    %328 = arith.addf %327, %325 : vector<8x128xf32>
    %cst_127 = arith.constant 0.000000e+00 : f32
    %329 = vector.broadcast %cst_127 : f32 to vector<8x128xf32>
    %330 = arith.cmpf ogt, %289, %329 : vector<8x128xf32>
    %cst_128 = arith.constant 7.500000e-01 : f32
    %331 = vector.broadcast %cst_128 : f32 to vector<8x128xf32>
    %332 = arith.mulf %285, %331 : vector<8x128xf32>
    %cst_129 = arith.constant 0.000000e+00 : f32
    %333 = vector.broadcast %cst_129 : f32 to vector<8x128xf32>
    %334 = arith.select %330, %333, %332 : vector<8x128xi1>, vector<8x128xf32>
    %335 = arith.addf %334, %328 : vector<8x128xf32>
    %cst_130 = arith.constant 5.000000e-01 : f32
    %336 = vector.broadcast %cst_130 : f32 to vector<8x128xf32>
    %337 = arith.cmpf ogt, %335, %336 : vector<8x128xf32>
    %338 = arith.extui %337 : vector<8x128xi1> to vector<8x128xi32>
    %339 = arith.sitofp %338 : vector<8x128xi32> to vector<8x128xf32>
    %340 = arith.truncf %339 : vector<8x128xf32> to vector<8x128xbf16>
    %cst_131 = arith.constant dense<0.000000e+00> : vector<8x128xf32>
    %341 = tpu.matmul %340, %1, %cst_131 {dimension_numbers = #tpu.dot_dimension_numbers<[1], [0], [0], [1], [0, 0, 1, 1], [], []>} : vector<8x128xbf16>, vector<128x128xbf16>, vector<8x128xf32> -> vector<8x128xf32>
    %342 = arith.addf %341, %5 : vector<8x128xf32>
    %cst_132 = arith.constant 5.000000e-01 : f32
    %343 = vector.broadcast %cst_132 : f32 to vector<8x128xf32>
    %344 = arith.mulf %295, %343 : vector<8x128xf32>
    %345 = arith.addf %344, %342 : vector<8x128xf32>
    %cst_133 = arith.constant 0.000000e+00 : f32
    %346 = vector.broadcast %cst_133 : f32 to vector<8x128xf32>
    %347 = arith.cmpf ogt, %306, %346 : vector<8x128xf32>
    %cst_134 = arith.constant 7.500000e-01 : f32
    %348 = vector.broadcast %cst_134 : f32 to vector<8x128xf32>
    %349 = arith.mulf %302, %348 : vector<8x128xf32>
    %cst_135 = arith.constant 0.000000e+00 : f32
    %350 = vector.broadcast %cst_135 : f32 to vector<8x128xf32>
    %351 = arith.select %347, %350, %349 : vector<8x128xi1>, vector<8x128xf32>
    %352 = arith.addf %351, %345 : vector<8x128xf32>
    %cst_136 = arith.constant 5.000000e-01 : f32
    %353 = vector.broadcast %cst_136 : f32 to vector<8x128xf32>
    %354 = arith.cmpf ogt, %352, %353 : vector<8x128xf32>
    %355 = arith.extui %354 : vector<8x128xi1> to vector<8x128xi32>
    %356 = arith.sitofp %355 : vector<8x128xi32> to vector<8x128xf32>
    %357 = arith.truncf %356 : vector<8x128xf32> to vector<8x128xbf16>
    %cst_137 = arith.constant dense<0.000000e+00> : vector<8x128xf32>
    %358 = tpu.matmul %357, %2, %cst_137 {dimension_numbers = #tpu.dot_dimension_numbers<[1], [0], [0], [1], [0, 0, 1, 1], [], []>} : vector<8x128xbf16>, vector<128x128xbf16>, vector<8x128xf32> -> vector<8x128xf32>
    %359 = arith.addf %358, %8 : vector<8x128xf32>
    %cst_138 = arith.constant 5.000000e-01 : f32
    %360 = vector.broadcast %cst_138 : f32 to vector<8x128xf32>
    %361 = arith.mulf %312, %360 : vector<8x128xf32>
    %362 = arith.addf %361, %359 : vector<8x128xf32>
    %cst_139 = arith.constant 0.000000e+00 : f32
    %363 = vector.broadcast %cst_139 : f32 to vector<8x128xf32>
    %364 = arith.cmpf ogt, %323, %363 : vector<8x128xf32>
    %cst_140 = arith.constant 7.500000e-01 : f32
    %365 = vector.broadcast %cst_140 : f32 to vector<8x128xf32>
    %366 = arith.mulf %319, %365 : vector<8x128xf32>
    %cst_141 = arith.constant 0.000000e+00 : f32
    %367 = vector.broadcast %cst_141 : f32 to vector<8x128xf32>
    %368 = arith.select %364, %367, %366 : vector<8x128xi1>, vector<8x128xf32>
    %369 = arith.addf %368, %362 : vector<8x128xf32>
    %cst_142 = arith.constant 5.000000e-01 : f32
    %370 = vector.broadcast %cst_142 : f32 to vector<8x128xf32>
    %371 = arith.cmpf ogt, %369, %370 : vector<8x128xf32>
    %372 = arith.extui %371 : vector<8x128xi1> to vector<8x128xi32>
    %373 = arith.sitofp %372 : vector<8x128xi32> to vector<8x128xf32>
    %374 = arith.addf %324, %373 : vector<8x128xf32>
    %375 = vector.extract_strided_slice %14 {offsets = [56, 0], sizes = [8, 128], strides = [1, 1]} : vector<64x128xf32> to vector<8x128xf32>
    %cst_143 = arith.constant 5.000000e-01 : f32
    %376 = vector.broadcast %cst_143 : f32 to vector<8x128xf32>
    %377 = arith.mulf %328, %376 : vector<8x128xf32>
    %378 = arith.addf %377, %375 : vector<8x128xf32>
    %cst_144 = arith.constant 0.000000e+00 : f32
    %379 = vector.broadcast %cst_144 : f32 to vector<8x128xf32>
    %380 = arith.cmpf ogt, %339, %379 : vector<8x128xf32>
    %cst_145 = arith.constant 7.500000e-01 : f32
    %381 = vector.broadcast %cst_145 : f32 to vector<8x128xf32>
    %382 = arith.mulf %335, %381 : vector<8x128xf32>
    %cst_146 = arith.constant 0.000000e+00 : f32
    %383 = vector.broadcast %cst_146 : f32 to vector<8x128xf32>
    %384 = arith.select %380, %383, %382 : vector<8x128xi1>, vector<8x128xf32>
    %385 = arith.addf %384, %378 : vector<8x128xf32>
    %cst_147 = arith.constant 5.000000e-01 : f32
    %386 = vector.broadcast %cst_147 : f32 to vector<8x128xf32>
    %387 = arith.cmpf ogt, %385, %386 : vector<8x128xf32>
    %388 = arith.extui %387 : vector<8x128xi1> to vector<8x128xi32>
    %389 = arith.sitofp %388 : vector<8x128xi32> to vector<8x128xf32>
    %390 = arith.truncf %389 : vector<8x128xf32> to vector<8x128xbf16>
    %cst_148 = arith.constant dense<0.000000e+00> : vector<8x128xf32>
    %391 = tpu.matmul %390, %1, %cst_148 {dimension_numbers = #tpu.dot_dimension_numbers<[1], [0], [0], [1], [0, 0, 1, 1], [], []>} : vector<8x128xbf16>, vector<128x128xbf16>, vector<8x128xf32> -> vector<8x128xf32>
    %392 = arith.addf %391, %5 : vector<8x128xf32>
    %cst_149 = arith.constant 5.000000e-01 : f32
    %393 = vector.broadcast %cst_149 : f32 to vector<8x128xf32>
    %394 = arith.mulf %345, %393 : vector<8x128xf32>
    %395 = arith.addf %394, %392 : vector<8x128xf32>
    %cst_150 = arith.constant 0.000000e+00 : f32
    %396 = vector.broadcast %cst_150 : f32 to vector<8x128xf32>
    %397 = arith.cmpf ogt, %356, %396 : vector<8x128xf32>
    %cst_151 = arith.constant 7.500000e-01 : f32
    %398 = vector.broadcast %cst_151 : f32 to vector<8x128xf32>
    %399 = arith.mulf %352, %398 : vector<8x128xf32>
    %cst_152 = arith.constant 0.000000e+00 : f32
    %400 = vector.broadcast %cst_152 : f32 to vector<8x128xf32>
    %401 = arith.select %397, %400, %399 : vector<8x128xi1>, vector<8x128xf32>
    %402 = arith.addf %401, %395 : vector<8x128xf32>
    %cst_153 = arith.constant 5.000000e-01 : f32
    %403 = vector.broadcast %cst_153 : f32 to vector<8x128xf32>
    %404 = arith.cmpf ogt, %402, %403 : vector<8x128xf32>
    %405 = arith.extui %404 : vector<8x128xi1> to vector<8x128xi32>
    %406 = arith.sitofp %405 : vector<8x128xi32> to vector<8x128xf32>
    %407 = arith.truncf %406 : vector<8x128xf32> to vector<8x128xbf16>
    %cst_154 = arith.constant dense<0.000000e+00> : vector<8x128xf32>
    %408 = tpu.matmul %407, %2, %cst_154 {dimension_numbers = #tpu.dot_dimension_numbers<[1], [0], [0], [1], [0, 0, 1, 1], [], []>} : vector<8x128xbf16>, vector<128x128xbf16>, vector<8x128xf32> -> vector<8x128xf32>
    %409 = arith.addf %408, %8 : vector<8x128xf32>
    %cst_155 = arith.constant 5.000000e-01 : f32
    %410 = vector.broadcast %cst_155 : f32 to vector<8x128xf32>
    %411 = arith.mulf %362, %410 : vector<8x128xf32>
    %412 = arith.addf %411, %409 : vector<8x128xf32>
    %cst_156 = arith.constant 0.000000e+00 : f32
    %413 = vector.broadcast %cst_156 : f32 to vector<8x128xf32>
    %414 = arith.cmpf ogt, %373, %413 : vector<8x128xf32>
    %cst_157 = arith.constant 7.500000e-01 : f32
    %415 = vector.broadcast %cst_157 : f32 to vector<8x128xf32>
    %416 = arith.mulf %369, %415 : vector<8x128xf32>
    %cst_158 = arith.constant 0.000000e+00 : f32
    %417 = vector.broadcast %cst_158 : f32 to vector<8x128xf32>
    %418 = arith.select %414, %417, %416 : vector<8x128xi1>, vector<8x128xf32>
    %419 = arith.addf %418, %412 : vector<8x128xf32>
    %cst_159 = arith.constant 5.000000e-01 : f32
    %420 = vector.broadcast %cst_159 : f32 to vector<8x128xf32>
    %421 = arith.cmpf ogt, %419, %420 : vector<8x128xf32>
    %422 = arith.extui %421 : vector<8x128xi1> to vector<8x128xi32>
    %423 = arith.sitofp %422 : vector<8x128xi32> to vector<8x128xf32>
    %424 = arith.addf %374, %423 : vector<8x128xf32>
    %cst_160 = arith.constant 1.250000e-01 : f32
    %425 = vector.broadcast %cst_160 : f32 to vector<8x128xf32>
    %426 = arith.mulf %424, %425 : vector<8x128xf32>
    %c0_161 = arith.constant 0 : index
    %c0_162 = arith.constant 0 : index
    %427 = vector.load %arg8[%c0_161, %c0_162] : memref<8x128xf32, #tpu.memory_space<vmem>>, vector<8x128xf32>
    tpu.vector_store %arg8[%c0_161, %c0_162], %426 {strides = array<i32>} : memref<8x128xf32, #tpu.memory_space<vmem>>, vector<8x128xf32>,
    return
  }
  func.func @transform_0(%arg0: i32) -> (i32, i32, i32) {
    %c0_i32 = arith.constant 0 : i32
    %c0_i32_0 = arith.constant 0 : i32
    %c0_i32_1 = arith.constant 0 : i32
    return %arg0, %c0_i32, %c0_i32_0 : i32, i32, i32
  }
  func.func @transform_1(%arg0: i32) -> (i32, i32) {
    %c0_i32 = arith.constant 0 : i32
    %c0_i32_0 = arith.constant 0 : i32
    %c0_i32_1 = arith.constant 0 : i32
    return %c0_i32, %c0_i32_0 : i32, i32
  }
  func.func @transform_2(%arg0: i32) -> (i32, i32) {
    %c0_i32 = arith.constant 0 : i32
    %c0_i32_0 = arith.constant 0 : i32
    %c0_i32_1 = arith.constant 0 : i32
    return %c0_i32, %c0_i32_0 : i32, i32
  }
  func.func @transform_3(%arg0: i32) -> (i32, i32) {
    %c0_i32 = arith.constant 0 : i32
    %c0_i32_0 = arith.constant 0 : i32
    %c0_i32_1 = arith.constant 0 : i32
    return %c0_i32, %c0_i32_0 : i32, i32
  }
  func.func @transform_4(%arg0: i32) -> (i32, i32) {
    %c0_i32 = arith.constant 0 : i32
    %c0_i32_0 = arith.constant 0 : i32
    %c0_i32_1 = arith.constant 0 : i32
    return %c0_i32, %c0_i32_0 : i32, i32
  }
  func.func @transform_5(%arg0: i32) -> (i32, i32) {
    %c0_i32 = arith.constant 0 : i32
    %c0_i32_0 = arith.constant 0 : i32
    %c0_i32_1 = arith.constant 0 : i32
    return %c0_i32, %c0_i32_0 : i32, i32
  }
  func.func @transform_6(%arg0: i32) -> (i32, i32) {
    %c0_i32 = arith.constant 0 : i32
    %c0_i32_0 = arith.constant 0 : i32
    %c0_i32_1 = arith.constant 0 : i32
    return %c0_i32, %c0_i32_0 : i32, i32
  }
  func.func @transform_7(%arg0: i32) -> (i32, i32) {
    %c0_i32 = arith.constant 0 : i32
    %c0_i32_0 = arith.constant 0 : i32
    return %arg0, %c0_i32 : i32, i32
  }
}

</mosaic_0001>

<llo_original>
// kernel: tpu_custom_call.1
$region0: #{tpu_custom_call.1}
  #allocation0 [shape = 'u32[]', space=smem, size = 0x4, offset = 0x4, fixed_abs, tag = 'smem constant byte address 0x4 - core index']
  #allocation1 [shape = 'u32[144,128]{1,0:T(1,128)}', space=vmem, size = 0x12000, scoped, tag = 'internal scratch']
  %s0 = inlined_call_operand.hbm [shape: bf16[1,64,128], index: 0, kind: input, shape index: {}]
  %s1 = inlined_call_operand.hbm [shape: bf16[128,128], index: 1, kind: input, shape index: {}]
  %s2 = inlined_call_operand.vmem [shape: f32[1,128], index: 2, kind: input, shape index: {}]
  %s3 = inlined_call_operand.hbm [shape: bf16[128,128], index: 3, kind: input, shape index: {}]
  %s4 = inlined_call_operand.vmem [shape: f32[1,128], index: 4, kind: input, shape index: {}]
  %s5 = inlined_call_operand.hbm [shape: bf16[128,128], index: 5, kind: input, shape index: {}]
  %s6 = inlined_call_operand.vmem [shape: f32[1,128], index: 6, kind: input, shape index: {}]
  %s7 = inlined_call_operand.hbm [shape: f32[8,128], index: 7, kind: output, shape index: {}]
  %s8 = sld [smem:[#allocation0]]
  $region54: #{tpu_custom_call.1} parent=0
    _
  %s10 = ssub.s32 1, %s8
  %s11 = scalar_select 0, %s10, %s8
  $region1: #{tpu_custom_call.1} parent=0
    #allocation2 [shape = 'u8[16384]{0}', space=vmem, size = 0x4000, scoped, tag = 'input window, operand 0, single buffered']
    #allocation3 [shape = 's32[1]{0}', space=sflag, size = 0x4, scoped, tag = 'scoped memory for tpu_custom_call.1']
    #allocation4 [shape = 's32[1]{0}', space=sflag, size = 0x4, scoped, tag = 'scoped memory for tpu_custom_call.1']
    #allocation5 [shape = 'u8[32768]{0}', space=vmem, size = 0x8000, scoped, tag = 'input window, operand 1, single buffered']
    #allocation6 [shape = 's32[1]{0}', space=sflag, size = 0x4, scoped, tag = 'scoped memory for tpu_custom_call.1']
    #allocation7 [shape = 'u8[32768]{0}', space=vmem, size = 0x8000, scoped, tag = 'input window, operand 3, single buffered']
    #allocation8 [shape = 'u8[32768]{0}', space=vmem, size = 0x8000, scoped, tag = 'input window, operand 5, single buffered']
    #allocation9 [shape = 's32[1]{0}', space=sflag, size = 0x4, scoped, tag = 'scoped memory for tpu_custom_call.1']
    #allocation10 [shape = 'u8[4096]{0}', space=vmem, size = 0x1000, scoped, tag = 'output window, operand 0, single buffered']
    %12 = vsyncpa [#allocation3], 0
    %13 = vsyncpa [#allocation6], 0
    %14 = vsyncpa [#allocation9], 0
    %15 = vsyncpa [#allocation4], 0
    // Predicated region
    $region2: #{tpu_custom_call.1} parent=1 // pred_check
      _
    $region3: #{tpu_custom_call.1} parent=1 // pred_check_branch
      %17 = sbr.rel (0) target = $region5
    $region4: #{tpu_custom_call.1} parent=1 // pred_region
      %s19 = ssub.s32 512, 512
      %20 = vsyncadd [#allocation3], %s19
      %s21 = sshll.u32 [#allocation2], 4
      %s22 = int_to_ptr.vmem [resolvable:$true] %s21
      %27 = dma.hbm_to_vmem [thread:$0]  %s0, 512, %s22, [#allocation3], 64, 64, 4
    $region5: #{tpu_custom_call.1} parent=1 // pred_fallthru
      _
    // Predicated region
    $region6: #{tpu_custom_call.1} parent=1 // pred_check
      _
    $region7: #{tpu_custom_call.1} parent=1 // pred_check_branch
      %29 = sbr.rel (0) target = $region9
    $region8: #{tpu_custom_call.1} parent=1 // pred_region
      %s31 = ssub.s32 1024, 1024
      %32 = vsyncadd [#allocation6], %s31
      %s33 = sshll.u32 [#allocation5], 4
      %s34 = int_to_ptr.vmem [resolvable:$true] %s33
      %39 = dma.hbm_to_vmem [thread:$0]  %s1, 1024, %s34, [#allocation6], 64, 64, 4
    $region9: #{tpu_custom_call.1} parent=1 // pred_fallthru
      _
    // Predicated region
    $region10: #{tpu_custom_call.1} parent=1 // pred_check
      _
    $region11: #{tpu_custom_call.1} parent=1 // pred_check_branch
      %41 = sbr.rel (0) target = $region13
    $region12: #{tpu_custom_call.1} parent=1 // pred_region
      _
    $region13: #{tpu_custom_call.1} parent=1 // pred_fallthru
      _
    // Predicated region
    $region14: #{tpu_custom_call.1} parent=1 // pred_check
      _
    $region15: #{tpu_custom_call.1} parent=1 // pred_check_branch
      %43 = sbr.rel (0) target = $region17
    $region16: #{tpu_custom_call.1} parent=1 // pred_region
      %s45 = ssub.s32 1024, 1024
      %46 = vsyncadd [#allocation6], %s45
      %s47 = sshll.u32 [#allocation7], 4
      %s48 = int_to_ptr.vmem [resolvable:$true] %s47
      %53 = dma.hbm_to_vmem [thread:$0]  %s3, 1024, %s48, [#allocation6], 64, 64, 4
    $region17: #{tpu_custom_call.1} parent=1 // pred_fallthru
      _
    // Predicated region
    $region18: #{tpu_custom_call.1} parent=1 // pred_check
      _
    $region19: #{tpu_custom_call.1} parent=1 // pred_check_branch
      %55 = sbr.rel (0) target = $region21
    $region20: #{tpu_custom_call.1} parent=1 // pred_region
      _
    $region21: #{tpu_custom_call.1} parent=1 // pred_fallthru
      _
    // Predicated region
    $region22: #{tpu_custom_call.1} parent=1 // pred_check
      _
    $region23: #{tpu_custom_call.1} parent=1 // pred_check_branch
      %57 = sbr.rel (0) target = $region25
    $region24: #{tpu_custom_call.1} parent=1 // pred_region
      %s59 = ssub.s32 1024, 1024
      %60 = vsyncadd [#allocation9], %s59
      %s61 = sshll.u32 [#allocation8], 4
      %s62 = int_to_ptr.vmem [resolvable:$true] %s61
      %67 = dma.hbm_to_vmem [thread:$0]  %s5, 1024, %s62, [#allocation9], 64, 64, 4
    $region25: #{tpu_custom_call.1} parent=1 // pred_fallthru
      _
    // Predicated region
    $region26: #{tpu_custom_call.1} parent=1 // pred_check
      _
    $region27: #{tpu_custom_call.1} parent=1 // pred_check_branch
      %69 = sbr.rel (0) target = $region29
    $region28: #{tpu_custom_call.1} parent=1 // pred_region
      _
    $region29: #{tpu_custom_call.1} parent=1 // pred_fallthru
      _
    // Predicated region
    $region30: #{tpu_custom_call.1} parent=1 // pred_check
      _
    $region31: #{tpu_custom_call.1} parent=1 // pred_check_branch
      %71 = sbr.rel (0) target = $region33
    $region32: #{tpu_custom_call.1} parent=1 // pred_region
      %72 = dma.done [#allocation3], 512
    $region33: #{tpu_custom_call.1} parent=1 // pred_fallthru
      _
    // Predicated region
    $region34: #{tpu_custom_call.1} parent=1 // pred_check
      _
    $region35: #{tpu_custom_call.1} parent=1 // pred_check_branch
      %74 = sbr.rel (0) target = $region37
    $region36: #{tpu_custom_call.1} parent=1 // pred_region
      %75 = dma.done [#allocation6], 1024
    $region37: #{tpu_custom_call.1} parent=1 // pred_fallthru
      _
    // Predicated region
    $region38: #{tpu_custom_call.1} parent=1 // pred_check
      _
    $region39: #{tpu_custom_call.1} parent=1 // pred_check_branch
      %77 = sbr.rel (0) target = $region41
    $region40: #{tpu_custom_call.1} parent=1 // pred_region
      %78 = dma.done [#allocation6], 1024
    $region41: #{tpu_custom_call.1} parent=1 // pred_fallthru
      _
    // Predicated region
    $region42: #{tpu_custom_call.1} parent=1 // pred_check
      _
    $region43: #{tpu_custom_call.1} parent=1 // pred_check_branch
      %80 = sbr.rel (0) target = $region45
    $region44: #{tpu_custom_call.1} parent=1 // pred_region
      %81 = dma.done [#allocation9], 1024
    $region45: #{tpu_custom_call.1} parent=1 // pred_fallthru
      _
    %v83 = vld [vmem:[#allocation5] sm:$0xf]
    %v84 = vld [vmem:[#allocation5 + $0x4] sm:$0xf]
    %v85 = vld [vmem:[#allocation5 + $0x8] sm:$0xf]
    %v86 = vld [vmem:[#allocation5 + $0xc] sm:$0xf]
    %v87 = vld [vmem:[#allocation5 + $0x10] sm:$0xf]
    %v88 = vld [vmem:[#allocation5 + $0x14] sm:$0xf]
    %v89 = vld [vmem:[#allocation5 + $0x18] sm:$0xf]
    %v90 = vld [vmem:[#allocation5 + $0x1c] sm:$0xf]
    %v91 = vld [vmem:[#allocation5 + $0x20] sm:$0xf]
    %v92 = vld [vmem:[#allocation5 + $0x24] sm:$0xf]
    %v93 = vld [vmem:[#allocation5 + $0x28] sm:$0xf]
    %v94 = vld [vmem:[#allocation5 + $0x2c] sm:$0xf]
    %v95 = vld [vmem:[#allocation5 + $0x30] sm:$0xf]
    %v96 = vld [vmem:[#allocation5 + $0x34] sm:$0xf]
    %v97 = vld [vmem:[#allocation5 + $0x38] sm:$0xf]
    %v98 = vld [vmem:[#allocation5 + $0x3c] sm:$0xf]
    %v99 = vld [vmem:[#allocation7] sm:$0xf]
    %v100 = vld [vmem:[#allocation7 + $0x4] sm:$0xf]
    %v101 = vld [vmem:[#allocation7 + $0x8] sm:$0xf]
    %v102 = vld [vmem:[#allocation7 + $0xc] sm:$0xf]
    %v103 = vld [vmem:[#allocation7 + $0x10] sm:$0xf]
    %v104 = vld [vmem:[#allocation7 + $0x14] sm:$0xf]
    %v105 = vld [vmem:[#allocation7 + $0x18] sm:$0xf]
    %v106 = vld [vmem:[#allocation7 + $0x1c] sm:$0xf]
    %v107 = vld [vmem:[#allocation7 + $0x20] sm:$0xf]
    %v108 = vld [vmem:[#allocation7 + $0x24] sm:$0xf]
    %v109 = vld [vmem:[#allocation7 + $0x28] sm:$0xf]
    %v110 = vld [vmem:[#allocation7 + $0x2c] sm:$0xf]
    %v111 = vld [vmem:[#allocation7 + $0x30] sm:$0xf]
    %v112 = vld [vmem:[#allocation7 + $0x34] sm:$0xf]
    %v113 = vld [vmem:[#allocation7 + $0x38] sm:$0xf]
    %v114 = vld [vmem:[#allocation7 + $0x3c] sm:$0xf]
    %v115 = vld [vmem:[#allocation8] sm:$0xf]
    %v116 = vld [vmem:[#allocation8 + $0x4] sm:$0xf]
    %v117 = vld [vmem:[#allocation8 + $0x8] sm:$0xf]
    %v118 = vld [vmem:[#allocation8 + $0xc] sm:$0xf]
    %v119 = vld [vmem:[#allocation8 + $0x10] sm:$0xf]
    %v120 = vld [vmem:[#allocation8 + $0x14] sm:$0xf]
    %v121 = vld [vmem:[#allocation8 + $0x18] sm:$0xf]
    %v122 = vld [vmem:[#allocation8 + $0x1c] sm:$0xf]
    %v123 = vld [vmem:[#allocation8 + $0x20] sm:$0xf]
    %v124 = vld [vmem:[#allocation8 + $0x24] sm:$0xf]
    %v125 = vld [vmem:[#allocation8 + $0x28] sm:$0xf]
    %v126 = vld [vmem:[#allocation8 + $0x2c] sm:$0xf]
    %v127 = vld [vmem:[#allocation8 + $0x30] sm:$0xf]
    %v128 = vld [vmem:[#allocation8 + $0x34] sm:$0xf]
    %v129 = vld [vmem:[#allocation8 + $0x38] sm:$0xf]
    %v130 = vld [vmem:[#allocation8 + $0x3c] sm:$0xf]
    %v131 = vld [vmem:[%s4] sm:$0x1]
    %v133 = vlaneseq
    %v134 = vshrl.u32 %v133, 7
    %v135 = vsub.s32 0, %v134
    %v136 = vrot.slane %v131, %v135
    %v138 = vld [vmem:[%s6] sm:$0x1]
    %v140 = vlaneseq
    %v141 = vshrl.u32 %v140, 7
    %v142 = vsub.s32 0, %v141
    %v143 = vrot.slane %v138, %v142
    %v145 = vld [vmem:[#allocation2] sm:$0xf]
    %v146 = vld [vmem:[#allocation2 + $0x4] sm:$0xf]
    %v147 = vld [vmem:[#allocation2 + $0x8] sm:$0xf]
    %v148 = vld [vmem:[#allocation2 + $0xc] sm:$0xf]
    %v149 = vld [vmem:[#allocation2 + $0x10] sm:$0xf]
    %v150 = vld [vmem:[#allocation2 + $0x14] sm:$0xf]
    %v151 = vld [vmem:[#allocation2 + $0x18] sm:$0xf]
    %v152 = vld [vmem:[#allocation2 + $0x1c] sm:$0xf]
    %v153 = vld [vmem:[%s2] sm:$0x1]
    %v155 = vlaneseq
    %v156 = vshrl.u32 %v155, 7
    %v157 = vsub.s32 0, %v156
    %v158 = vrot.slane %v153, %v157
    %v168 = vunpack.c.l.b16 %v145
    %v169 = vunpack.c.l.b16 %v146
    %v170 = vunpack.c.l.b16 %v147
    %v171 = vunpack.c.l.b16 %v148
    %v172 = vunpack.c.l.b16 %v149
    %v173 = vunpack.c.l.b16 %v150
    %v174 = vunpack.c.l.b16 %v151
    %v175 = vunpack.c.l.b16 %v152
    %v176 = vpack.c.b16 %v169, %v168
    %v177 = vpack.c.b16 %v171, %v170
    %v178 = vpack.c.b16 %v173, %v172
    %v179 = vpack.c.b16 %v175, %v174
    %v200 = vunpack.c.l.b16 %v83
    %v201 = vunpack.c.l.b16 %v84
    %v202 = vunpack.c.l.b16 %v85
    %v203 = vunpack.c.l.b16 %v86
    %v204 = vunpack.c.l.b16 %v87
    %v205 = vunpack.c.l.b16 %v88
    %v206 = vunpack.c.l.b16 %v89
    %v207 = vunpack.c.l.b16 %v90
    %v208 = vunpack.c.l.b16 %v91
    %v209 = vunpack.c.l.b16 %v92
    %v210 = vunpack.c.l.b16 %v93
    %v211 = vunpack.c.l.b16 %v94
    %v212 = vunpack.c.l.b16 %v95
    %v213 = vunpack.c.l.b16 %v96
    %v214 = vunpack.c.l.b16 %v97
    %v215 = vunpack.c.l.b16 %v98
    %v216 = vpack.c.b16 %v201, %v200
    %v217 = vpack.c.b16 %v203, %v202
    %v218 = vpack.c.b16 %v205, %v204
    %v219 = vpack.c.b16 %v207, %v206
    %v220 = vpack.c.b16 %v209, %v208
    %v221 = vpack.c.b16 %v211, %v210
    %v222 = vpack.c.b16 %v213, %v212
    %v223 = vpack.c.b16 %v215, %v214
    %232 = vmatprep.subr.bf16.mxu0 0
    %233 = vmatpush1.bf16.msra.mxu0 %v216
    %234 = vmatprep.subr.bf16.mxu0 0
    %235 = vmatpush1.bf16.msra.mxu0 %v217
    %236 = vmatprep.subr.bf16.mxu0 0
    %237 = vmatpush1.bf16.msra.mxu0 %v218
    %238 = vmatprep.subr.bf16.mxu0 0
    %239 = vmatpush1.bf16.msra.mxu0 %v219
    %240 = vmatprep.subr.bf16.mxu0 0
    %241 = vmatpush1.bf16.msra.mxu0 %v220
    %242 = vmatprep.subr.bf16.mxu0 0
    %243 = vmatpush1.bf16.msra.mxu0 %v221
    %244 = vmatprep.subr.bf16.mxu0 0
    %245 = vmatpush1.bf16.msra.mxu0 %v222
    %246 = vmatprep.subr.bf16.mxu0 0
    %247 = vmatpush1.bf16.msra.mxu0 %v223
    %248 = vmatprep.subr.bf16.mxu0 0
    %249 = vmatpush1.bf16.msra.mxu0 0
    %250 = vmatprep.subr.bf16.mxu0 0
    %251 = vmatpush1.bf16.msra.mxu0 0
    %252 = vmatprep.subr.bf16.mxu0 0
    %253 = vmatpush1.bf16.msra.mxu0 0
    %254 = vmatprep.subr.bf16.mxu0 0
    %255 = vmatpush1.bf16.msra.mxu0 0
    %256 = vmatprep.subr.bf16.mxu0 0
    %257 = vmatpush1.bf16.msra.mxu0 0
    %258 = vmatprep.subr.bf16.mxu0 0
    %259 = vmatpush1.bf16.msra.mxu0 0
    %260 = vmatprep.subr.bf16.mxu0 0
    %261 = vmatpush1.bf16.msra.mxu0 0
    %262 = vmatprep.subr.bf16.mxu0 0
    %263 = vmatpush1.bf16.msra.mxu0 0
    %264 = vmatprep.mubr.bf16.mxu0 0
    %265 = vmatmul.mubr.bf16.gmra.mrb[0].mxu0 %v176
    %v266 = vpop.f32.mrb[0].mxu0
    %v267 = vadd.f32 %v158, %v266
    %v268 = vpop.f32.mrb[0].mxu0
    %v269 = vpop.f32.mrb[0].mxu0
    %v270 = vadd.f32 %v158, %v269
    %v271 = vpop.f32.mrb[0].mxu0
    %272 = vmatprep.mubr.bf16.mxu0 0
    %273 = vmatmul.mubr.bf16.gmra.mrb[0].mxu0 %v177
    %v274 = vpop.f32.mrb[0].mxu0
    %v275 = vadd.f32 %v158, %v274
    %v276 = vpop.f32.mrb[0].mxu0
    %v277 = vpop.f32.mrb[0].mxu0
    %v278 = vadd.f32 %v158, %v277
    %v279 = vpop.f32.mrb[0].mxu0
    %280 = vmatprep.mubr.bf16.mxu0 0
    %281 = vmatmul.mubr.bf16.gmra.mrb[0].mxu0 %v178
    %v282 = vpop.f32.mrb[0].mxu0
    %v283 = vadd.f32 %v158, %v282
    %v284 = vpop.f32.mrb[0].mxu0
    %v285 = vpop.f32.mrb[0].mxu0
    %v286 = vadd.f32 %v158, %v285
    %v287 = vpop.f32.mrb[0].mxu0
    %288 = vmatprep.mubr.bf16.mxu0 0
    %289 = vmatmul.mubr.bf16.gmra.mrb[0].mxu0 %v179
    %v290 = vpop.f32.mrb[0].mxu0
    %v291 = vadd.f32 %v158, %v290
    %v292 = vpop.f32.mrb[0].mxu0
    %v293 = vpop.f32.mrb[0].mxu0
    %v294 = vadd.f32 %v158, %v293
    %v295 = vpop.f32.mrb[0].mxu0
    %296 = vdwg.mxu0
    %v297 = vadd.f32 %v267, 0.0
    %v298 = vadd.f32 %v297, 0.0
    %vm299 = vcmp.gt.f32.partialorder %v298, 0.5
    %v300 = vsel %vm299, 1, 0
    %v301 = vcvt.s32.f32 %v300
    %v302 = vpack.c.bf16 %v301, %v301
    %v319 = vunpack.c.l.b16 %v99
    %v320 = vunpack.c.l.b16 %v100
    %v321 = vunpack.c.l.b16 %v101
    %v322 = vunpack.c.l.b16 %v102
    %v323 = vunpack.c.l.b16 %v103
    %v324 = vunpack.c.l.b16 %v104
    %v325 = vunpack.c.l.b16 %v105
    %v326 = vunpack.c.l.b16 %v106
    %v327 = vunpack.c.l.b16 %v107
    %v328 = vunpack.c.l.b16 %v108
    %v329 = vunpack.c.l.b16 %v109
    %v330 = vunpack.c.l.b16 %v110
    %v331 = vunpack.c.l.b16 %v111
    %v332 = vunpack.c.l.b16 %v112
    %v333 = vunpack.c.l.b16 %v113
    %v334 = vunpack.c.l.b16 %v114
    %v335 = vpack.c.b16 %v320, %v319
    %v336 = vpack.c.b16 %v322, %v321
    %v337 = vpack.c.b16 %v324, %v323
    %v338 = vpack.c.b16 %v326, %v325
    %v339 = vpack.c.b16 %v328, %v327
    %v340 = vpack.c.b16 %v330, %v329
    %v341 = vpack.c.b16 %v332, %v331
    %v342 = vpack.c.b16 %v334, %v333
    %351 = vmatprep.subr.bf16.mxu0 0
    %352 = vmatpush1.bf16.msra.mxu0 %v335
    %353 = vmatprep.subr.bf16.mxu0 0
    %354 = vmatpush1.bf16.msra.mxu0 %v336
    %355 = vmatprep.subr.bf16.mxu0 0
    %356 = vmatpush1.bf16.msra.mxu0 %v337
    %357 = vmatprep.subr.bf16.mxu0 0
    %358 = vmatpush1.bf16.msra.mxu0 %v338
    %359 = vmatprep.subr.bf16.mxu0 0
    %360 = vmatpush1.bf16.msra.mxu0 %v339
    %361 = vmatprep.subr.bf16.mxu0 0
    %362 = vmatpush1.bf16.msra.mxu0 %v340
    %363 = vmatprep.subr.bf16.mxu0 0
    %364 = vmatpush1.bf16.msra.mxu0 %v341
    %365 = vmatprep.subr.bf16.mxu0 0
    %366 = vmatpush1.bf16.msra.mxu0 %v342
    %367 = vmatprep.subr.bf16.mxu0 0
    %368 = vmatpush1.bf16.msra.mxu0 0
    %369 = vmatprep.subr.bf16.mxu0 0
    %370 = vmatpush1.bf16.msra.mxu0 0
    %371 = vmatprep.subr.bf16.mxu0 0
    %372 = vmatpush1.bf16.msra.mxu0 0
    %373 = vmatprep.subr.bf16.mxu0 0
    %374 = vmatpush1.bf16.msra.mxu0 0
    %375 = vmatprep.subr.bf16.mxu0 0
    %376 = vmatpush1.bf16.msra.mxu0 0
    %377 = vmatprep.subr.bf16.mxu0 0
    %378 = vmatpush1.bf16.msra.mxu0 0
    %379 = vmatprep.subr.bf16.mxu0 0
    %380 = vmatpush1.bf16.msra.mxu0 0
    %381 = vmatprep.subr.bf16.mxu0 0
    %382 = vmatpush1.bf16.msra.mxu0 0
    %383 = vmatprep.mubr.bf16.mxu0 0
    %384 = vmatmul.mubr.bf16.gmra.mrb[0].mxu0 %v302
    %v385 = vpop.f32.mrb[0].mxu0
    %v386 = vadd.f32 %v136, %v385
    %v387 = vpop.f32.mrb[0].mxu0
    %v388 = vpop.f32.mrb[0].mxu0
    %v389 = vpop.f32.mrb[0].mxu0
    %390 = vdwg.mxu0
    %v391 = vadd.f32 %v386, 0.0
    %v392 = vadd.f32 %v391, 0.0
    %vm393 = vcmp.gt.f32.partialorder %v392, 0.5
    %v394 = vsel %vm393, 1, 0
    %v395 = vcvt.s32.f32 %v394
    %v396 = vpack.c.bf16 %v395, %v395
    %v413 = vunpack.c.l.b16 %v115
    %v414 = vunpack.c.l.b16 %v116
    %v415 = vunpack.c.l.b16 %v117
    %v416 = vunpack.c.l.b16 %v118
    %v417 = vunpack.c.l.b16 %v119
    %v418 = vunpack.c.l.b16 %v120
    %v419 = vunpack.c.l.b16 %v121
    %v420 = vunpack.c.l.b16 %v122
    %v421 = vunpack.c.l.b16 %v123
    %v422 = vunpack.c.l.b16 %v124
    %v423 = vunpack.c.l.b16 %v125
    %v424 = vunpack.c.l.b16 %v126
    %v425 = vunpack.c.l.b16 %v127
    %v426 = vunpack.c.l.b16 %v128
    %v427 = vunpack.c.l.b16 %v129
    %v428 = vunpack.c.l.b16 %v130
    %v429 = vpack.c.b16 %v414, %v413
    %v430 = vpack.c.b16 %v416, %v415
    %v431 = vpack.c.b16 %v418, %v417
    %v432 = vpack.c.b16 %v420, %v419
    %v433 = vpack.c.b16 %v422, %v421
    %v434 = vpack.c.b16 %v424, %v423
    %v435 = vpack.c.b16 %v426, %v425
    %v436 = vpack.c.b16 %v428, %v427
    %445 = vmatprep.subr.bf16.mxu0 0
    %446 = vmatpush1.bf16.msra.mxu0 %v429
    %447 = vmatprep.subr.bf16.mxu0 0
    %448 = vmatpush1.bf16.msra.mxu0 %v430
    %449 = vmatprep.subr.bf16.mxu0 0
    %450 = vmatpush1.bf16.msra.mxu0 %v431
    %451 = vmatprep.subr.bf16.mxu0 0
    %452 = vmatpush1.bf16.msra.mxu0 %v432
    %453 = vmatprep.subr.bf16.mxu0 0
    %454 = vmatpush1.bf16.msra.mxu0 %v433
    %455 = vmatprep.subr.bf16.mxu0 0
    %456 = vmatpush1.bf16.msra.mxu0 %v434
    %457 = vmatprep.subr.bf16.mxu0 0
    %458 = vmatpush1.bf16.msra.mxu0 %v435
    %459 = vmatprep.subr.bf16.mxu0 0
    %460 = vmatpush1.bf16.msra.mxu0 %v436
    %461 = vmatprep.subr.bf16.mxu0 0
    %462 = vmatpush1.bf16.msra.mxu0 0
    %463 = vmatprep.subr.bf16.mxu0 0
    %464 = vmatpush1.bf16.msra.mxu0 0
    %465 = vmatprep.subr.bf16.mxu0 0
    %466 = vmatpush1.bf16.msra.mxu0 0
    %467 = vmatprep.subr.bf16.mxu0 0
    %468 = vmatpush1.bf16.msra.mxu0 0
    %469 = vmatprep.subr.bf16.mxu0 0
    %470 = vmatpush1.bf16.msra.mxu0 0
    %471 = vmatprep.subr.bf16.mxu0 0
    %472 = vmatpush1.bf16.msra.mxu0 0
    %473 = vmatprep.subr.bf16.mxu0 0
    %474 = vmatpush1.bf16.msra.mxu0 0
    %475 = vmatprep.subr.bf16.mxu0 0
    %476 = vmatpush1.bf16.msra.mxu0 0
    %477 = vmatprep.mubr.bf16.mxu0 0
    %478 = vmatmul.mubr.bf16.gmra.mrb[0].mxu0 %v396
    %v479 = vpop.f32.mrb[0].mxu0
    %v480 = vadd.f32 %v143, %v479
    %v481 = vpop.f32.mrb[0].mxu0
    %v482 = vpop.f32.mrb[0].mxu0
    %v483 = vpop.f32.mrb[0].mxu0
    %484 = vdwg.mxu0
    %v485 = vadd.f32 %v480, 0.0
    %v486 = vadd.f32 %v485, 0.0
    %vm487 = vcmp.gt.f32.partialorder %v486, 0.5
    %v488 = vsel %vm487, 1, 0
    %v489 = vcvt.s32.f32 %v488
    %v490 = vadd.f32 %v489, 0.0
    %v491 = vmul.f32 %v297, 0.5
    %v492 = vadd.f32 %v491, %v270
    %vm493 = vcmp.gt.f32.partialorder %v301, 0.0
    %v494 = vmul.f32 %v298, 0.75
    %v495 = vsel %vm493, 0.0, %v494
    %v496 = vadd.f32 %v495, %v492
    %vm497 = vcmp.gt.f32.partialorder %v496, 0.5
    %v498 = vsel %vm497, 1, 0
    %v499 = vcvt.s32.f32 %v498
    %v500 = vpack.c.bf16 %v499, %v499
    %501 = vmatprep.subr.bf16.mxu0 0
    %502 = vmatpush1.bf16.msra.mxu0 %v335
    %503 = vmatprep.subr.bf16.mxu0 0
    %504 = vmatpush1.bf16.msra.mxu0 %v336
    %505 = vmatprep.subr.bf16.mxu0 0
    %506 = vmatpush1.bf16.msra.mxu0 %v337
    %507 = vmatprep.subr.bf16.mxu0 0
    %508 = vmatpush1.bf16.msra.mxu0 %v338
    %509 = vmatprep.subr.bf16.mxu0 0
    %510 = vmatpush1.bf16.msra.mxu0 %v339
    %511 = vmatprep.subr.bf16.mxu0 0
    %512 = vmatpush1.bf16.msra.mxu0 %v340
    %513 = vmatprep.subr.bf16.mxu0 0
    %514 = vmatpush1.bf16.msra.mxu0 %v341
    %515 = vmatprep.subr.bf16.mxu0 0
    %516 = vmatpush1.bf16.msra.mxu0 %v342
    %517 = vmatprep.subr.bf16.mxu0 0
    %518 = vmatpush1.bf16.msra.mxu0 0
    %519 = vmatprep.subr.bf16.mxu0 0
    %520 = vmatpush1.bf16.msra.mxu0 0
    %521 = vmatprep.subr.bf16.mxu0 0
    %522 = vmatpush1.bf16.msra.mxu0 0
    %523 = vmatprep.subr.bf16.mxu0 0
    %524 = vmatpush1.bf16.msra.mxu0 0
    %525 = vmatprep.subr.bf16.mxu0 0
    %526 = vmatpush1.bf16.msra.mxu0 0
    %527 = vmatprep.subr.bf16.mxu0 0
    %528 = vmatpush1.bf16.msra.mxu0 0
    %529 = vmatprep.subr.bf16.mxu0 0
    %530 = vmatpush1.bf16.msra.mxu0 0
    %531 = vmatprep.subr.bf16.mxu0 0
    %532 = vmatpush1.bf16.msra.mxu0 0
    %533 = vmatprep.mubr.bf16.mxu0 0
    %534 = vmatmul.mubr.bf16.gmra.mrb[0].mxu0 %v500
    %v535 = vpop.f32.mrb[0].mxu0
    %v536 = vadd.f32 %v136, %v535
    %v537 = vpop.f32.mrb[0].mxu0
    %v538 = vpop.f32.mrb[0].mxu0
    %v539 = vpop.f32.mrb[0].mxu0
    %540 = vdwg.mxu0
    %v541 = vmul.f32 %v391, 0.5
    %v542 = vadd.f32 %v541, %v536
    %vm543 = vcmp.gt.f32.partialorder %v395, 0.0
    %v544 = vmul.f32 %v392, 0.75
    %v545 = vsel %vm543, 0.0, %v544
    %v546 = vadd.f32 %v545, %v542
    %vm547 = vcmp.gt.f32.partialorder %v546, 0.5
    %v548 = vsel %vm547, 1, 0
    %v549 = vcvt.s32.f32 %v548
    %v550 = vpack.c.bf16 %v549, %v549
    %551 = vmatprep.subr.bf16.mxu0 0
    %552 = vmatpush1.bf16.msra.mxu0 %v429
    %553 = vmatprep.subr.bf16.mxu0 0
    %554 = vmatpush1.bf16.msra.mxu0 %v430
    %555 = vmatprep.subr.bf16.mxu0 0
    %556 = vmatpush1.bf16.msra.mxu0 %v431
    %557 = vmatprep.subr.bf16.mxu0 0
    %558 = vmatpush1.bf16.msra.mxu0 %v432
    %559 = vmatprep.subr.bf16.mxu0 0
    %560 = vmatpush1.bf16.msra.mxu0 %v433
    %561 = vmatprep.subr.bf16.mxu0 0
    %562 = vmatpush1.bf16.msra.mxu0 %v434
    %563 = vmatprep.subr.bf16.mxu0 0
    %564 = vmatpush1.bf16.msra.mxu0 %v435
    %565 = vmatprep.subr.bf16.mxu0 0
    %566 = vmatpush1.bf16.msra.mxu0 %v436
    %567 = vmatprep.subr.bf16.mxu0 0
    %568 = vmatpush1.bf16.msra.mxu0 0
    %569 = vmatprep.subr.bf16.mxu0 0
    %570 = vmatpush1.bf16.msra.mxu0 0
    %571 = vmatprep.subr.bf16.mxu0 0
    %572 = vmatpush1.bf16.msra.mxu0 0
    %573 = vmatprep.subr.bf16.mxu0 0
    %574 = vmatpush1.bf16.msra.mxu0 0
    %575 = vmatprep.subr.bf16.mxu0 0
    %576 = vmatpush1.bf16.msra.mxu0 0
    %577 = vmatprep.subr.bf16.mxu0 0
    %578 = vmatpush1.bf16.msra.mxu0 0
    %579 = vmatprep.subr.bf16.mxu0 0
    %580 = vmatpush1.bf16.msra.mxu0 0
    %581 = vmatprep.subr.bf16.mxu0 0
    %582 = vmatpush1.bf16.msra.mxu0 0
    %583 = vmatprep.mubr.bf16.mxu0 0
    %584 = vmatmul.mubr.bf16.gmra.mrb[0].mxu0 %v550
    %v585 = vpop.f32.mrb[0].mxu0
    %v586 = vadd.f32 %v143, %v585
    %v587 = vpop.f32.mrb[0].mxu0
    %v588 = vpop.f32.mrb[0].mxu0
    %v589 = vpop.f32.mrb[0].mxu0
    %590 = vdwg.mxu0
    %v591 = vmul.f32 %v485, 0.5
    %v592 = vadd.f32 %v591, %v586
    %vm593 = vcmp.gt.f32.partialorder %v489, 0.0
    %v594 = vmul.f32 %v486, 0.75
    %v595 = vsel %vm593, 0.0, %v594
    %v596 = vadd.f32 %v595, %v592
    %vm597 = vcmp.gt.f32.partialorder %v596, 0.5
    %v598 = vsel %vm597, 1, 0
    %v599 = vcvt.s32.f32 %v598
    %v600 = vadd.f32 %v490, %v599
    %v601 = vmul.f32 %v492, 0.5
    %v602 = vadd.f32 %v601, %v275
    %vm603 = vcmp.gt.f32.partialorder %v499, 0.0
    %v604 = vmul.f32 %v496, 0.75
    %v605 = vsel %vm603, 0.0, %v604
    %v606 = vadd.f32 %v605, %v602
    %vm607 = vcmp.gt.f32.partialorder %v606, 0.5
    %v608 = vsel %vm607, 1, 0
    %v609 = vcvt.s32.f32 %v608
    %v610 = vpack.c.bf16 %v609, %v609
    %611 = vmatprep.subr.bf16.mxu0 0
    %612 = vmatpush1.bf16.msra.mxu0 %v335
    %613 = vmatprep.subr.bf16.mxu0 0
    %614 = vmatpush1.bf16.msra.mxu0 %v336
    %615 = vmatprep.subr.bf16.mxu0 0
    %616 = vmatpush1.bf16.msra.mxu0 %v337
    %617 = vmatprep.subr.bf16.mxu0 0
    %618 = vmatpush1.bf16.msra.mxu0 %v338
    %619 = vmatprep.subr.bf16.mxu0 0
    %620 = vmatpush1.bf16.msra.mxu0 %v339
    %621 = vmatprep.subr.bf16.mxu0 0
    %622 = vmatpush1.bf16.msra.mxu0 %v340
    %623 = vmatprep.subr.bf16.mxu0 0
    %624 = vmatpush1.bf16.msra.mxu0 %v341
    %625 = vmatprep.subr.bf16.mxu0 0
    %626 = vmatpush1.bf16.msra.mxu0 %v342
    %627 = vmatprep.subr.bf16.mxu0 0
    %628 = vmatpush1.bf16.msra.mxu0 0
    %629 = vmatprep.subr.bf16.mxu0 0
    %630 = vmatpush1.bf16.msra.mxu0 0
    %631 = vmatprep.subr.bf16.mxu0 0
    %632 = vmatpush1.bf16.msra.mxu0 0
    %633 = vmatprep.subr.bf16.mxu0 0
    %634 = vmatpush1.bf16.msra.mxu0 0
    %635 = vmatprep.subr.bf16.mxu0 0
    %636 = vmatpush1.bf16.msra.mxu0 0
    %637 = vmatprep.subr.bf16.mxu0 0
    %638 = vmatpush1.bf16.msra.mxu0 0
    %639 = vmatprep.subr.bf16.mxu0 0
    %640 = vmatpush1.bf16.msra.mxu0 0
    %641 = vmatprep.subr.bf16.mxu0 0
    %642 = vmatpush1.bf16.msra.mxu0 0
    %643 = vmatprep.mubr.bf16.mxu0 0
    %644 = vmatmul.mubr.bf16.gmra.mrb[0].mxu0 %v610
    %v645 = vpop.f32.mrb[0].mxu0
    %v646 = vadd.f32 %v136, %v645
    %v647 = vpop.f32.mrb[0].mxu0
    %v648 = vpop.f32.mrb[0].mxu0
    %v649 = vpop.f32.mrb[0].mxu0
    %650 = vdwg.mxu0
    %v651 = vmul.f32 %v542, 0.5
    %v652 = vadd.f32 %v651, %v646
    %vm653 = vcmp.gt.f32.partialorder %v549, 0.0
    %v654 = vmul.f32 %v546, 0.75
    %v655 = vsel %vm653, 0.0, %v654
    %v656 = vadd.f32 %v655, %v652
    %vm657 = vcmp.gt.f32.partialorder %v656, 0.5
    %v658 = vsel %vm657, 1, 0
    %v659 = vcvt.s32.f32 %v658
    %v660 = vpack.c.bf16 %v659, %v659
    %661 = vmatprep.subr.bf16.mxu0 0
    %662 = vmatpush1.bf16.msra.mxu0 %v429
    %663 = vmatprep.subr.bf16.mxu0 0
    %664 = vmatpush1.bf16.msra.mxu0 %v430
    %665 = vmatprep.subr.bf16.mxu0 0
    %666 = vmatpush1.bf16.msra.mxu0 %v431
    %667 = vmatprep.subr.bf16.mxu0 0
    %668 = vmatpush1.bf16.msra.mxu0 %v432
    %669 = vmatprep.subr.bf16.mxu0 0
    %670 = vmatpush1.bf16.msra.mxu0 %v433
    %671 = vmatprep.subr.bf16.mxu0 0
    %672 = vmatpush1.bf16.msra.mxu0 %v434
    %673 = vmatprep.subr.bf16.mxu0 0
    %674 = vmatpush1.bf16.msra.mxu0 %v435
    %675 = vmatprep.subr.bf16.mxu0 0
    %676 = vmatpush1.bf16.msra.mxu0 %v436
    %677 = vmatprep.subr.bf16.mxu0 0
    %678 = vmatpush1.bf16.msra.mxu0 0
    %679 = vmatprep.subr.bf16.mxu0 0
    %680 = vmatpush1.bf16.msra.mxu0 0
    %681 = vmatprep.subr.bf16.mxu0 0
    %682 = vmatpush1.bf16.msra.mxu0 0
    %683 = vmatprep.subr.bf16.mxu0 0
    %684 = vmatpush1.bf16.msra.mxu0 0
    %685 = vmatprep.subr.bf16.mxu0 0
    %686 = vmatpush1.bf16.msra.mxu0 0
    %687 = vmatprep.subr.bf16.mxu0 0
    %688 = vmatpush1.bf16.msra.mxu0 0
    %689 = vmatprep.subr.bf16.mxu0 0
    %690 = vmatpush1.bf16.msra.mxu0 0
    %691 = vmatprep.subr.bf16.mxu0 0
    %692 = vmatpush1.bf16.msra.mxu0 0
    %693 = vmatprep.mubr.bf16.mxu0 0
    %694 = vmatmul.mubr.bf16.gmra.mrb[0].mxu0 %v660
    %v695 = vpop.f32.mrb[0].mxu0
    %v696 = vadd.f32 %v143, %v695
    %v697 = vpop.f32.mrb[0].mxu0
    %v698 = vpop.f32.mrb[0].mxu0
    %v699 = vpop.f32.mrb[0].mxu0
    %700 = vdwg.mxu0
    %v701 = vmul.f32 %v592, 0.5
    %v702 = vadd.f32 %v701, %v696
    %vm703 = vcmp.gt.f32.partialorder %v599, 0.0
    %v704 = vmul.f32 %v596, 0.75
    %v705 = vsel %vm703, 0.0, %v704
    %v706 = vadd.f32 %v705, %v702
    %vm707 = vcmp.gt.f32.partialorder %v706, 0.5
    %v708 = vsel %vm707, 1, 0
    %v709 = vcvt.s32.f32 %v708
    %v710 = vadd.f32 %v600, %v709
    %v711 = vmul.f32 %v602, 0.5
    %v712 = vadd.f32 %v711, %v278
    %vm713 = vcmp.gt.f32.partialorder %v609, 0.0
    %v714 = vmul.f32 %v606, 0.75
    %v715 = vsel %vm713, 0.0, %v714
    %v716 = vadd.f32 %v715, %v712
    %vm717 = vcmp.gt.f32.partialorder %v716, 0.5
    %v718 = vsel %vm717, 1, 0
    %v719 = vcvt.s32.f32 %v718
    %v720 = vpack.c.bf16 %v719, %v719
    %721 = vmatprep.subr.bf16.mxu0 0
    %722 = vmatpush1.bf16.msra.mxu0 %v335
    %723 = vmatprep.subr.bf16.mxu0 0
    %724 = vmatpush1.bf16.msra.mxu0 %v336
    %725 = vmatprep.subr.bf16.mxu0 0
    %726 = vmatpush1.bf16.msra.mxu0 %v337
    %727 = vmatprep.subr.bf16.mxu0 0
    %728 = vmatpush1.bf16.msra.mxu0 %v338
    %729 = vmatprep.subr.bf16.mxu0 0
    %730 = vmatpush1.bf16.msra.mxu0 %v339
    %731 = vmatprep.subr.bf16.mxu0 0
    %732 = vmatpush1.bf16.msra.mxu0 %v340
    %733 = vmatprep.subr.bf16.mxu0 0
    %734 = vmatpush1.bf16.msra.mxu0 %v341
    %735 = vmatprep.subr.bf16.mxu0 0
    %736 = vmatpush1.bf16.msra.mxu0 %v342
    %737 = vmatprep.subr.bf16.mxu0 0
    %738 = vmatpush1.bf16.msra.mxu0 0
    %739 = vmatprep.subr.bf16.mxu0 0
    %740 = vmatpush1.bf16.msra.mxu0 0
    %741 = vmatprep.subr.bf16.mxu0 0
    %742 = vmatpush1.bf16.msra.mxu0 0
    %743 = vmatprep.subr.bf16.mxu0 0
    %744 = vmatpush1.bf16.msra.mxu0 0
    %745 = vmatprep.subr.bf16.mxu0 0
    %746 = vmatpush1.bf16.msra.mxu0 0
    %747 = vmatprep.subr.bf16.mxu0 0
    %748 = vmatpush1.bf16.msra.mxu0 0
    %749 = vmatprep.subr.bf16.mxu0 0
    %750 = vmatpush1.bf16.msra.mxu0 0
    %751 = vmatprep.subr.bf16.mxu0 0
    %752 = vmatpush1.bf16.msra.mxu0 0
    %753 = vmatprep.mubr.bf16.mxu0 0
    %754 = vmatmul.mubr.bf16.gmra.mrb[0].mxu0 %v720
    %v755 = vpop.f32.mrb[0].mxu0
    %v756 = vadd.f32 %v136, %v755
    %v757 = vpop.f32.mrb[0].mxu0
    %v758 = vpop.f32.mrb[0].mxu0
    %v759 = vpop.f32.mrb[0].mxu0
    %760 = vdwg.mxu0
    %v761 = vmul.f32 %v652, 0.5
    %v762 = vadd.f32 %v761, %v756
    %vm763 = vcmp.gt.f32.partialorder %v659, 0.0
    %v764 = vmul.f32 %v656, 0.75
    %v765 = vsel %vm763, 0.0, %v764
    %v766 = vadd.f32 %v765, %v762
    %vm767 = vcmp.gt.f32.partialorder %v766, 0.5
    %v768 = vsel %vm767, 1, 0
    %v769 = vcvt.s32.f32 %v768
    %v770 = vpack.c.bf16 %v769, %v769
    %771 = vmatprep.subr.bf16.mxu0 0
    %772 = vmatpush1.bf16.msra.mxu0 %v429
    %773 = vmatprep.subr.bf16.mxu0 0
    %774 = vmatpush1.bf16.msra.mxu0 %v430
    %775 = vmatprep.subr.bf16.mxu0 0
    %776 = vmatpush1.bf16.msra.mxu0 %v431
    %777 = vmatprep.subr.bf16.mxu0 0
    %778 = vmatpush1.bf16.msra.mxu0 %v432
    %779 = vmatprep.subr.bf16.mxu0 0
    %780 = vmatpush1.bf16.msra.mxu0 %v433
    %781 = vmatprep.subr.bf16.mxu0 0
    %782 = vmatpush1.bf16.msra.mxu0 %v434
    %783 = vmatprep.subr.bf16.mxu0 0
    %784 = vmatpush1.bf16.msra.mxu0 %v435
    %785 = vmatprep.subr.bf16.mxu0 0
    %786 = vmatpush1.bf16.msra.mxu0 %v436
    %787 = vmatprep.subr.bf16.mxu0 0
    %788 = vmatpush1.bf16.msra.mxu0 0
    %789 = vmatprep.subr.bf16.mxu0 0
    %790 = vmatpush1.bf16.msra.mxu0 0
    %791 = vmatprep.subr.bf16.mxu0 0
    %792 = vmatpush1.bf16.msra.mxu0 0
    %793 = vmatprep.subr.bf16.mxu0 0
    %794 = vmatpush1.bf16.msra.mxu0 0
    %795 = vmatprep.subr.bf16.mxu0 0
    %796 = vmatpush1.bf16.msra.mxu0 0
    %797 = vmatprep.subr.bf16.mxu0 0
    %798 = vmatpush1.bf16.msra.mxu0 0
    %799 = vmatprep.subr.bf16.mxu0 0
    %800 = vmatpush1.bf16.msra.mxu0 0
    %801 = vmatprep.subr.bf16.mxu0 0
    %802 = vmatpush1.bf16.msra.mxu0 0
    %803 = vmatprep.mubr.bf16.mxu0 0
    %804 = vmatmul.mubr.bf16.gmra.mrb[0].mxu0 %v770
    %v805 = vpop.f32.mrb[0].mxu0
    %v806 = vadd.f32 %v143, %v805
    %v807 = vpop.f32.mrb[0].mxu0
    %v808 = vpop.f32.mrb[0].mxu0
    %v809 = vpop.f32.mrb[0].mxu0
    %810 = vdwg.mxu0
    %v811 = vmul.f32 %v702, 0.5
    %v812 = vadd.f32 %v811, %v806
    %vm813 = vcmp.gt.f32.partialorder %v709, 0.0
    %v814 = vmul.f32 %v706, 0.75
    %v815 = vsel %vm813, 0.0, %v814
    %v816 = vadd.f32 %v815, %v812
    %vm817 = vcmp.gt.f32.partialorder %v816, 0.5
    %v818 = vsel %vm817, 1, 0
    %v819 = vcvt.s32.f32 %v818
    %v820 = vadd.f32 %v710, %v819
    %v821 = vmul.f32 %v712, 0.5
    %v822 = vadd.f32 %v821, %v283
    %vm823 = vcmp.gt.f32.partialorder %v719, 0.0
    %v824 = vmul.f32 %v716, 0.75
    %v825 = vsel %vm823, 0.0, %v824
    %v826 = vadd.f32 %v825, %v822
    %vm827 = vcmp.gt.f32.partialorder %v826, 0.5
    %v828 = vsel %vm827, 1, 0
    %v829 = vcvt.s32.f32 %v828
    %v830 = vpack.c.bf16 %v829, %v829
    %831 = vmatprep.subr.bf16.mxu0 0
    %832 = vmatpush1.bf16.msra.mxu0 %v335
    %833 = vmatprep.subr.bf16.mxu0 0
    %834 = vmatpush1.bf16.msra.mxu0 %v336
    %835 = vmatprep.subr.bf16.mxu0 0
    %836 = vmatpush1.bf16.msra.mxu0 %v337
    %837 = vmatprep.subr.bf16.mxu0 0
    %838 = vmatpush1.bf16.msra.mxu0 %v338
    %839 = vmatprep.subr.bf16.mxu0 0
    %840 = vmatpush1.bf16.msra.mxu0 %v339
    %841 = vmatprep.subr.bf16.mxu0 0
    %842 = vmatpush1.bf16.msra.mxu0 %v340
    %843 = vmatprep.subr.bf16.mxu0 0
    %844 = vmatpush1.bf16.msra.mxu0 %v341
    %845 = vmatprep.subr.bf16.mxu0 0
    %846 = vmatpush1.bf16.msra.mxu0 %v342
    %847 = vmatprep.subr.bf16.mxu0 0
    %848 = vmatpush1.bf16.msra.mxu0 0
    %849 = vmatprep.subr.bf16.mxu0 0
    %850 = vmatpush1.bf16.msra.mxu0 0
    %851 = vmatprep.subr.bf16.mxu0 0
    %852 = vmatpush1.bf16.msra.mxu0 0
    %853 = vmatprep.subr.bf16.mxu0 0
    %854 = vmatpush1.bf16.msra.mxu0 0
    %855 = vmatprep.subr.bf16.mxu0 0
    %856 = vmatpush1.bf16.msra.mxu0 0
    %857 = vmatprep.subr.bf16.mxu0 0
    %858 = vmatpush1.bf16.msra.mxu0 0
    %859 = vmatprep.subr.bf16.mxu0 0
    %860 = vmatpush1.bf16.msra.mxu0 0
    %861 = vmatprep.subr.bf16.mxu0 0
    %862 = vmatpush1.bf16.msra.mxu0 0
    %863 = vmatprep.mubr.bf16.mxu0 0
    %864 = vmatmul.mubr.bf16.gmra.mrb[0].mxu0 %v830
    %v865 = vpop.f32.mrb[0].mxu0
    %v866 = vadd.f32 %v136, %v865
    %v867 = vpop.f32.mrb[0].mxu0
    %v868 = vpop.f32.mrb[0].mxu0
    %v869 = vpop.f32.mrb[0].mxu0
    %870 = vdwg.mxu0
    %v871 = vmul.f32 %v762, 0.5
    %v872 = vadd.f32 %v871, %v866
    %vm873 = vcmp.gt.f32.partialorder %v769, 0.0
    %v874 = vmul.f32 %v766, 0.75
    %v875 = vsel %vm873, 0.0, %v874
    %v876 = vadd.f32 %v875, %v872
    %vm877 = vcmp.gt.f32.partialorder %v876, 0.5
    %v878 = vsel %vm877, 1, 0
    %v879 = vcvt.s32.f32 %v878
    %v880 = vpack.c.bf16 %v879, %v879
    %881 = vmatprep.subr.bf16.mxu0 0
    %882 = vmatpush1.bf16.msra.mxu0 %v429
    %883 = vmatprep.subr.bf16.mxu0 0
    %884 = vmatpush1.bf16.msra.mxu0 %v430
    %885 = vmatprep.subr.bf16.mxu0 0
    %886 = vmatpush1.bf16.msra.mxu0 %v431
    %887 = vmatprep.subr.bf16.mxu0 0
    %888 = vmatpush1.bf16.msra.mxu0 %v432
    %889 = vmatprep.subr.bf16.mxu0 0
    %890 = vmatpush1.bf16.msra.mxu0 %v433
    %891 = vmatprep.subr.bf16.mxu0 0
    %892 = vmatpush1.bf16.msra.mxu0 %v434
    %893 = vmatprep.subr.bf16.mxu0 0
    %894 = vmatpush1.bf16.msra.mxu0 %v435
    %895 = vmatprep.subr.bf16.mxu0 0
    %896 = vmatpush1.bf16.msra.mxu0 %v436
    %897 = vmatprep.subr.bf16.mxu0 0
    %898 = vmatpush1.bf16.msra.mxu0 0
    %899 = vmatprep.subr.bf16.mxu0 0
    %900 = vmatpush1.bf16.msra.mxu0 0
    %901 = vmatprep.subr.bf16.mxu0 0
    %902 = vmatpush1.bf16.msra.mxu0 0
    %903 = vmatprep.subr.bf16.mxu0 0
    %904 = vmatpush1.bf16.msra.mxu0 0
    %905 = vmatprep.subr.bf16.mxu0 0
    %906 = vmatpush1.bf16.msra.mxu0 0
    %907 = vmatprep.subr.bf16.mxu0 0
    %908 = vmatpush1.bf16.msra.mxu0 0
    %909 = vmatprep.subr.bf16.mxu0 0
    %910 = vmatpush1.bf16.msra.mxu0 0
    %911 = vmatprep.subr.bf16.mxu0 0
    %912 = vmatpush1.bf16.msra.mxu0 0
    %913 = vmatprep.mubr.bf16.mxu0 0
    %914 = vmatmul.mubr.bf16.gmra.mrb[0].mxu0 %v880
    %v915 = vpop.f32.mrb[0].mxu0
    %v916 = vadd.f32 %v143, %v915
    %v917 = vpop.f32.mrb[0].mxu0
    %v918 = vpop.f32.mrb[0].mxu0
    %v919 = vpop.f32.mrb[0].mxu0
    %920 = vdwg.mxu0
    %v921 = vmul.f32 %v812, 0.5
    %v922 = vadd.f32 %v921, %v916
    %vm923 = vcmp.gt.f32.partialorder %v819, 0.0
    %v924 = vmul.f32 %v816, 0.75
    %v925 = vsel %vm923, 0.0, %v924
    %v926 = vadd.f32 %v925, %v922
    %vm927 = vcmp.gt.f32.partialorder %v926, 0.5
    %v928 = vsel %vm927, 1, 0
    %v929 = vcvt.s32.f32 %v928
    %v930 = vadd.f32 %v820, %v929
    %v931 = vmul.f32 %v822, 0.5
    %v932 = vadd.f32 %v931, %v286
    %vm933 = vcmp.gt.f32.partialorder %v829, 0.0
    %v934 = vmul.f32 %v826, 0.75
    %v935 = vsel %vm933, 0.0, %v934
    %v936 = vadd.f32 %v935, %v932
    %vm937 = vcmp.gt.f32.partialorder %v936, 0.5
    %v938 = vsel %vm937, 1, 0
    %v939 = vcvt.s32.f32 %v938
    %v940 = vpack.c.bf16 %v939, %v939
    %941 = vmatprep.subr.bf16.mxu0 0
    %942 = vmatpush1.bf16.msra.mxu0 %v335
    %943 = vmatprep.subr.bf16.mxu0 0
    %944 = vmatpush1.bf16.msra.mxu0 %v336
    %945 = vmatprep.subr.bf16.mxu0 0
    %946 = vmatpush1.bf16.msra.mxu0 %v337
    %947 = vmatprep.subr.bf16.mxu0 0
    %948 = vmatpush1.bf16.msra.mxu0 %v338
    %949 = vmatprep.subr.bf16.mxu0 0
    %950 = vmatpush1.bf16.msra.mxu0 %v339
    %951 = vmatprep.subr.bf16.mxu0 0
    %952 = vmatpush1.bf16.msra.mxu0 %v340
    %953 = vmatprep.subr.bf16.mxu0 0
    %954 = vmatpush1.bf16.msra.mxu0 %v341
    %955 = vmatprep.subr.bf16.mxu0 0
    %956 = vmatpush1.bf16.msra.mxu0 %v342
    %957 = vmatprep.subr.bf16.mxu0 0
    %958 = vmatpush1.bf16.msra.mxu0 0
    %959 = vmatprep.subr.bf16.mxu0 0
    %960 = vmatpush1.bf16.msra.mxu0 0
    %961 = vmatprep.subr.bf16.mxu0 0
    %962 = vmatpush1.bf16.msra.mxu0 0
    %963 = vmatprep.subr.bf16.mxu0 0
    %964 = vmatpush1.bf16.msra.mxu0 0
    %965 = vmatprep.subr.bf16.mxu0 0
    %966 = vmatpush1.bf16.msra.mxu0 0
    %967 = vmatprep.subr.bf16.mxu0 0
    %968 = vmatpush1.bf16.msra.mxu0 0
    %969 = vmatprep.subr.bf16.mxu0 0
    %970 = vmatpush1.bf16.msra.mxu0 0
    %971 = vmatprep.subr.bf16.mxu0 0
    %972 = vmatpush1.bf16.msra.mxu0 0
    %973 = vmatprep.mubr.bf16.mxu0 0
    %974 = vmatmul.mubr.bf16.gmra.mrb[0].mxu0 %v940
    %v975 = vpop.f32.mrb[0].mxu0
    %v976 = vadd.f32 %v136, %v975
    %v977 = vpop.f32.mrb[0].mxu0
    %v978 = vpop.f32.mrb[0].mxu0
    %v979 = vpop.f32.mrb[0].mxu0
    %980 = vdwg.mxu0
    %v981 = vmul.f32 %v872, 0.5
    %v982 = vadd.f32 %v981, %v976
    %vm983 = vcmp.gt.f32.partialorder %v879, 0.0
    %v984 = vmul.f32 %v876, 0.75
    %v985 = vsel %vm983, 0.0, %v984
    %v986 = vadd.f32 %v985, %v982
    %vm987 = vcmp.gt.f32.partialorder %v986, 0.5
    %v988 = vsel %vm987, 1, 0
    %v989 = vcvt.s32.f32 %v988
    %v990 = vpack.c.bf16 %v989, %v989
    %991 = vmatprep.subr.bf16.mxu0 0
    %992 = vmatpush1.bf16.msra.mxu0 %v429
    %993 = vmatprep.subr.bf16.mxu0 0
    %994 = vmatpush1.bf16.msra.mxu0 %v430
    %995 = vmatprep.subr.bf16.mxu0 0
    %996 = vmatpush1.bf16.msra.mxu0 %v431
    %997 = vmatprep.subr.bf16.mxu0 0
    %998 = vmatpush1.bf16.msra.mxu0 %v432
    %999 = vmatprep.subr.bf16.mxu0 0
    %1000 = vmatpush1.bf16.msra.mxu0 %v433
    %1001 = vmatprep.subr.bf16.mxu0 0
    %1002 = vmatpush1.bf16.msra.mxu0 %v434
    %1003 = vmatprep.subr.bf16.mxu0 0
    %1004 = vmatpush1.bf16.msra.mxu0 %v435
    %1005 = vmatprep.subr.bf16.mxu0 0
    %1006 = vmatpush1.bf16.msra.mxu0 %v436
    %1007 = vmatprep.subr.bf16.mxu0 0
    %1008 = vmatpush1.bf16.msra.mxu0 0
    %1009 = vmatprep.subr.bf16.mxu0 0
    %1010 = vmatpush1.bf16.msra.mxu0 0
    %1011 = vmatprep.subr.bf16.mxu0 0
    %1012 = vmatpush1.bf16.msra.mxu0 0
    %1013 = vmatprep.subr.bf16.mxu0 0
    %1014 = vmatpush1.bf16.msra.mxu0 0
    %1015 = vmatprep.subr.bf16.mxu0 0
    %1016 = vmatpush1.bf16.msra.mxu0 0
    %1017 = vmatprep.subr.bf16.mxu0 0
    %1018 = vmatpush1.bf16.msra.mxu0 0
    %1019 = vmatprep.subr.bf16.mxu0 0
    %1020 = vmatpush1.bf16.msra.mxu0 0
    %1021 = vmatprep.subr.bf16.mxu0 0
    %1022 = vmatpush1.bf16.msra.mxu0 0
    %1023 = vmatprep.mubr.bf16.mxu0 0
    %1024 = vmatmul.mubr.bf16.gmra.mrb[0].mxu0 %v990
    %v1025 = vpop.f32.mrb[0].mxu0
    %v1026 = vadd.f32 %v143, %v1025
    %v1027 = vpop.f32.mrb[0].mxu0
    %v1028 = vpop.f32.mrb[0].mxu0
    %v1029 = vpop.f32.mrb[0].mxu0
    %1030 = vdwg.mxu0
    %v1031 = vmul.f32 %v922, 0.5
    %v1032 = vadd.f32 %v1031, %v1026
    %vm1033 = vcmp.gt.f32.partialorder %v929, 0.0
    %v1034 = vmul.f32 %v926, 0.75
    %v1035 = vsel %vm1033, 0.0, %v1034
    %v1036 = vadd.f32 %v1035, %v1032
    %vm1037 = vcmp.gt.f32.partialorder %v1036, 0.5
    %v1038 = vsel %vm1037, 1, 0
    %v1039 = vcvt.s32.f32 %v1038
    %v1040 = vadd.f32 %v930, %v1039
    %v1041 = vmul.f32 %v932, 0.5
    %v1042 = vadd.f32 %v1041, %v291
    %vm1043 = vcmp.gt.f32.partialorder %v939, 0.0
    %v1044 = vmul.f32 %v936, 0.75
    %v1045 = vsel %vm1043, 0.0, %v1044
    %v1046 = vadd.f32 %v1045, %v1042
    %vm1047 = vcmp.gt.f32.partialorder %v1046, 0.5
    %v1048 = vsel %vm1047, 1, 0
    %v1049 = vcvt.s32.f32 %v1048
    %v1050 = vpack.c.bf16 %v1049, %v1049
    %1051 = vmatprep.subr.bf16.mxu0 0
    %1052 = vmatpush1.bf16.msra.mxu0 %v335
    %1053 = vmatprep.subr.bf16.mxu0 0
    %1054 = vmatpush1.bf16.msra.mxu0 %v336
    %1055 = vmatprep.subr.bf16.mxu0 0
    %1056 = vmatpush1.bf16.msra.mxu0 %v337
    %1057 = vmatprep.subr.bf16.mxu0 0
    %1058 = vmatpush1.bf16.msra.mxu0 %v338
    %1059 = vmatprep.subr.bf16.mxu0 0
    %1060 = vmatpush1.bf16.msra.mxu0 %v339
    %1061 = vmatprep.subr.bf16.mxu0 0
    %1062 = vmatpush1.bf16.msra.mxu0 %v340
    %1063 = vmatprep.subr.bf16.mxu0 0
    %1064 = vmatpush1.bf16.msra.mxu0 %v341
    %1065 = vmatprep.subr.bf16.mxu0 0
    %1066 = vmatpush1.bf16.msra.mxu0 %v342
    %1067 = vmatprep.subr.bf16.mxu0 0
    %1068 = vmatpush1.bf16.msra.mxu0 0
    %1069 = vmatprep.subr.bf16.mxu0 0
    %1070 = vmatpush1.bf16.msra.mxu0 0
    %1071 = vmatprep.subr.bf16.mxu0 0
    %1072 = vmatpush1.bf16.msra.mxu0 0
    %1073 = vmatprep.subr.bf16.mxu0 0
    %1074 = vmatpush1.bf16.msra.mxu0 0
    %1075 = vmatprep.subr.bf16.mxu0 0
    %1076 = vmatpush1.bf16.msra.mxu0 0
    %1077 = vmatprep.subr.bf16.mxu0 0
    %1078 = vmatpush1.bf16.msra.mxu0 0
    %1079 = vmatprep.subr.bf16.mxu0 0
    %1080 = vmatpush1.bf16.msra.mxu0 0
    %1081 = vmatprep.subr.bf16.mxu0 0
    %1082 = vmatpush1.bf16.msra.mxu0 0
    %1083 = vmatprep.mubr.bf16.mxu0 0
    %1084 = vmatmul.mubr.bf16.gmra.mrb[0].mxu0 %v1050
    %v1085 = vpop.f32.mrb[0].mxu0
    %v1086 = vadd.f32 %v136, %v1085
    %v1087 = vpop.f32.mrb[0].mxu0
    %v1088 = vpop.f32.mrb[0].mxu0
    %v1089 = vpop.f32.mrb[0].mxu0
    %1090 = vdwg.mxu0
    %v1091 = vmul.f32 %v982, 0.5
    %v1092 = vadd.f32 %v1091, %v1086
    %vm1093 = vcmp.gt.f32.partialorder %v989, 0.0
    %v1094 = vmul.f32 %v986, 0.75
    %v1095 = vsel %vm1093, 0.0, %v1094
    %v1096 = vadd.f32 %v1095, %v1092
    %vm1097 = vcmp.gt.f32.partialorder %v1096, 0.5
    %v1098 = vsel %vm1097, 1, 0
    %v1099 = vcvt.s32.f32 %v1098
    %v1100 = vpack.c.bf16 %v1099, %v1099
    %1101 = vmatprep.subr.bf16.mxu0 0
    %1102 = vmatpush1.bf16.msra.mxu0 %v429
    %1103 = vmatprep.subr.bf16.mxu0 0
    %1104 = vmatpush1.bf16.msra.mxu0 %v430
    %1105 = vmatprep.subr.bf16.mxu0 0
    %1106 = vmatpush1.bf16.msra.mxu0 %v431
    %1107 = vmatprep.subr.bf16.mxu0 0
    %1108 = vmatpush1.bf16.msra.mxu0 %v432
    %1109 = vmatprep.subr.bf16.mxu0 0
    %1110 = vmatpush1.bf16.msra.mxu0 %v433
    %1111 = vmatprep.subr.bf16.mxu0 0
    %1112 = vmatpush1.bf16.msra.mxu0 %v434
    %1113 = vmatprep.subr.bf16.mxu0 0
    %1114 = vmatpush1.bf16.msra.mxu0 %v435
    %1115 = vmatprep.subr.bf16.mxu0 0
    %1116 = vmatpush1.bf16.msra.mxu0 %v436
    %1117 = vmatprep.subr.bf16.mxu0 0
    %1118 = vmatpush1.bf16.msra.mxu0 0
    %1119 = vmatprep.subr.bf16.mxu0 0
    %1120 = vmatpush1.bf16.msra.mxu0 0
    %1121 = vmatprep.subr.bf16.mxu0 0
    %1122 = vmatpush1.bf16.msra.mxu0 0
    %1123 = vmatprep.subr.bf16.mxu0 0
    %1124 = vmatpush1.bf16.msra.mxu0 0
    %1125 = vmatprep.subr.bf16.mxu0 0
    %1126 = vmatpush1.bf16.msra.mxu0 0
    %1127 = vmatprep.subr.bf16.mxu0 0
    %1128 = vmatpush1.bf16.msra.mxu0 0
    %1129 = vmatprep.subr.bf16.mxu0 0
    %1130 = vmatpush1.bf16.msra.mxu0 0
    %1131 = vmatprep.subr.bf16.mxu0 0
    %1132 = vmatpush1.bf16.msra.mxu0 0
    %1133 = vmatprep.mubr.bf16.mxu0 0
    %1134 = vmatmul.mubr.bf16.gmra.mrb[0].mxu0 %v1100
    %v1135 = vpop.f32.mrb[0].mxu0
    %v1136 = vadd.f32 %v143, %v1135
    %v1137 = vpop.f32.mrb[0].mxu0
    %v1138 = vpop.f32.mrb[0].mxu0
    %v1139 = vpop.f32.mrb[0].mxu0
    %1140 = vdwg.mxu0
    %v1141 = vmul.f32 %v1032, 0.5
    %v1142 = vadd.f32 %v1141, %v1136
    %vm1143 = vcmp.gt.f32.partialorder %v1039, 0.0
    %v1144 = vmul.f32 %v1036, 0.75
    %v1145 = vsel %vm1143, 0.0, %v1144
    %v1146 = vadd.f32 %v1145, %v1142
    %vm1147 = vcmp.gt.f32.partialorder %v1146, 0.5
    %v1148 = vsel %vm1147, 1, 0
    %v1149 = vcvt.s32.f32 %v1148
    %v1150 = vadd.f32 %v1040, %v1149
    %v1151 = vmul.f32 %v1042, 0.5
    %v1152 = vadd.f32 %v1151, %v294
    %vm1153 = vcmp.gt.f32.partialorder %v1049, 0.0
    %v1154 = vmul.f32 %v1046, 0.75
    %v1155 = vsel %vm1153, 0.0, %v1154
    %v1156 = vadd.f32 %v1155, %v1152
    %vm1157 = vcmp.gt.f32.partialorder %v1156, 0.5
    %v1158 = vsel %vm1157, 1, 0
    %v1159 = vcvt.s32.f32 %v1158
    %v1160 = vpack.c.bf16 %v1159, %v1159
    %1161 = vmatprep.subr.bf16.mxu0 0
    %1162 = vmatpush1.bf16.msra.mxu0 %v335
    %1163 = vmatprep.subr.bf16.mxu0 0
    %1164 = vmatpush1.bf16.msra.mxu0 %v336
    %1165 = vmatprep.subr.bf16.mxu0 0
    %1166 = vmatpush1.bf16.msra.mxu0 %v337
    %1167 = vmatprep.subr.bf16.mxu0 0
    %1168 = vmatpush1.bf16.msra.mxu0 %v338
    %1169 = vmatprep.subr.bf16.mxu0 0
    %1170 = vmatpush1.bf16.msra.mxu0 %v339
    %1171 = vmatprep.subr.bf16.mxu0 0
    %1172 = vmatpush1.bf16.msra.mxu0 %v340
    %1173 = vmatprep.subr.bf16.mxu0 0
    %1174 = vmatpush1.bf16.msra.mxu0 %v341
    %1175 = vmatprep.subr.bf16.mxu0 0
    %1176 = vmatpush1.bf16.msra.mxu0 %v342
    %1177 = vmatprep.subr.bf16.mxu0 0
    %1178 = vmatpush1.bf16.msra.mxu0 0
    %1179 = vmatprep.subr.bf16.mxu0 0
    %1180 = vmatpush1.bf16.msra.mxu0 0
    %1181 = vmatprep.subr.bf16.mxu0 0
    %1182 = vmatpush1.bf16.msra.mxu0 0
    %1183 = vmatprep.subr.bf16.mxu0 0
    %1184 = vmatpush1.bf16.msra.mxu0 0
    %1185 = vmatprep.subr.bf16.mxu0 0
    %1186 = vmatpush1.bf16.msra.mxu0 0
    %1187 = vmatprep.subr.bf16.mxu0 0
    %1188 = vmatpush1.bf16.msra.mxu0 0
    %1189 = vmatprep.subr.bf16.mxu0 0
    %1190 = vmatpush1.bf16.msra.mxu0 0
    %1191 = vmatprep.subr.bf16.mxu0 0
    %1192 = vmatpush1.bf16.msra.mxu0 0
    %1193 = vmatprep.mubr.bf16.mxu0 0
    %1194 = vmatmul.mubr.bf16.gmra.mrb[0].mxu0 %v1160
    %v1195 = vpop.f32.mrb[0].mxu0
    %v1196 = vadd.f32 %v136, %v1195
    %v1197 = vpop.f32.mrb[0].mxu0
    %v1198 = vpop.f32.mrb[0].mxu0
    %v1199 = vpop.f32.mrb[0].mxu0
    %1200 = vdwg.mxu0
    %v1201 = vmul.f32 %v1092, 0.5
    %v1202 = vadd.f32 %v1201, %v1196
    %vm1203 = vcmp.gt.f32.partialorder %v1099, 0.0
    %v1204 = vmul.f32 %v1096, 0.75
    %v1205 = vsel %vm1203, 0.0, %v1204
    %v1206 = vadd.f32 %v1205, %v1202
    %vm1207 = vcmp.gt.f32.partialorder %v1206, 0.5
    %v1208 = vsel %vm1207, 1, 0
    %v1209 = vcvt.s32.f32 %v1208
    %v1210 = vpack.c.bf16 %v1209, %v1209
    %1211 = vmatprep.subr.bf16.mxu0 0
    %1212 = vmatpush1.bf16.msra.mxu0 %v429
    %1213 = vmatprep.subr.bf16.mxu0 0
    %1214 = vmatpush1.bf16.msra.mxu0 %v430
    %1215 = vmatprep.subr.bf16.mxu0 0
    %1216 = vmatpush1.bf16.msra.mxu0 %v431
    %1217 = vmatprep.subr.bf16.mxu0 0
    %1218 = vmatpush1.bf16.msra.mxu0 %v432
    %1219 = vmatprep.subr.bf16.mxu0 0
    %1220 = vmatpush1.bf16.msra.mxu0 %v433
    %1221 = vmatprep.subr.bf16.mxu0 0
    %1222 = vmatpush1.bf16.msra.mxu0 %v434
    %1223 = vmatprep.subr.bf16.mxu0 0
    %1224 = vmatpush1.bf16.msra.mxu0 %v435
    %1225 = vmatprep.subr.bf16.mxu0 0
    %1226 = vmatpush1.bf16.msra.mxu0 %v436
    %1227 = vmatprep.subr.bf16.mxu0 0
    %1228 = vmatpush1.bf16.msra.mxu0 0
    %1229 = vmatprep.subr.bf16.mxu0 0
    %1230 = vmatpush1.bf16.msra.mxu0 0
    %1231 = vmatprep.subr.bf16.mxu0 0
    %1232 = vmatpush1.bf16.msra.mxu0 0
    %1233 = vmatprep.subr.bf16.mxu0 0
    %1234 = vmatpush1.bf16.msra.mxu0 0
    %1235 = vmatprep.subr.bf16.mxu0 0
    %1236 = vmatpush1.bf16.msra.mxu0 0
    %1237 = vmatprep.subr.bf16.mxu0 0
    %1238 = vmatpush1.bf16.msra.mxu0 0
    %1239 = vmatprep.subr.bf16.mxu0 0
    %1240 = vmatpush1.bf16.msra.mxu0 0
    %1241 = vmatprep.subr.bf16.mxu0 0
    %1242 = vmatpush1.bf16.msra.mxu0 0
    %1243 = vmatprep.mubr.bf16.mxu0 0
    %1244 = vmatmul.mubr.bf16.gmra.mrb[0].mxu0 %v1210
    %v1245 = vpop.f32.mrb[0].mxu0
    %v1246 = vadd.f32 %v143, %v1245
    %v1247 = vpop.f32.mrb[0].mxu0
    %v1248 = vpop.f32.mrb[0].mxu0
    %v1249 = vpop.f32.mrb[0].mxu0
    %1250 = vdwg.mxu0
    %v1251 = vmul.f32 %v1142, 0.5
    %v1252 = vadd.f32 %v1251, %v1246
    %vm1253 = vcmp.gt.f32.partialorder %v1149, 0.0
    %v1254 = vmul.f32 %v1146, 0.75
    %v1255 = vsel %vm1253, 0.0, %v1254
    %v1256 = vadd.f32 %v1255, %v1252
    %vm1257 = vcmp.gt.f32.partialorder %v1256, 0.5
    %v1258 = vsel %vm1257, 1, 0
    %v1259 = vcvt.s32.f32 %v1258
    %v1260 = vadd.f32 %v1150, %v1259
    %v1261 = vmul.f32 %v1260, 0.125
    %1262 = vst [vmem:[#allocation10] sm:$0xff] %v1261
    // Predicated region
    $region46: #{tpu_custom_call.1} parent=1 // pred_check
      _
    $region47: #{tpu_custom_call.1} parent=1 // pred_check_branch
      %1264 = sbr.rel (0) target = $region49
    $region48: #{tpu_custom_call.1} parent=1 // pred_region
      %s1266 = ssub.s32 128, 128
      %1267 = vsyncadd [#allocation4], %s1266
      %s1269 = sshll.u32 [#allocation10], 4
      %s1270 = int_to_ptr.vmem [resolvable:$true] %s1269
      %1272 = dma.vmem_to_hbm [thread:$0]  %s1270, 128, %s7, [#allocation4]
    $region49: #{tpu_custom_call.1} parent=1 // pred_fallthru
      _
    // Predicated region
    $region50: #{tpu_custom_call.1} parent=1 // pred_check
      _
    $region51: #{tpu_custom_call.1} parent=1 // pred_check_branch
      %1274 = sbr.rel (0) target = $region53
    $region52: #{tpu_custom_call.1} parent=1 // pred_region
      %1275 = dma.done [#allocation4], 128
    $region53: #{tpu_custom_call.1} parent=1 // pred_fallthru
      _
    %1276 = vsyncpa [#allocation3], 1
    %1277 = vsyncpa [#allocation6], 1
    %1278 = vsyncpa [#allocation9], 1
    %1279 = vsyncpa [#allocation4], 1

</llo_original>
